<compile_context>
chip_gen: v7x
topology: tpu7x:2x2x1
jax: 0.10.0
libtpu: 0.0.40
codegen_flags: <defaults>
</compile_context>

<pallas_src>
import functools

import jax
import jax.numpy as jnp
from jax.experimental import pallas as pl
from jax.experimental.pallas import tpu as pltpu


def _mha_kernel(x_ref, wqk_ref, bqk_ref, wvp_ref, bvp_ref, bp_ref, o_ref, *,
                heads, batch, seq):
    """Single-step kernel. x_ref: (B*T, D); o_ref: (B*T, D)."""
    D = x_ref.shape[1]
    dh = D // heads
    T = seq

    x = x_ref[...].astype(jnp.bfloat16)                         # (B*T, D) bf16

    # Fused Q|K projection (one MXU matmul for both batch elements & all heads).
    # Column layout: [ q heads | k heads ]; 1/sqrt(d) pre-folded into Q columns.
    qk = jnp.dot(x, wqk_ref[...], preferred_element_type=jnp.float32)
    qk = (qk + bqk_ref[...]).astype(jnp.bfloat16)               # (B*T, 2*D)

    # Fused V∘Wp projection: head h's folded value occupies columns h*D:(h+1)*D.
    vp = jnp.dot(x, wvp_ref[...], preferred_element_type=jnp.float32)
    vp = (vp + bvp_ref[...]).astype(jnp.bfloat16)               # (B*T, H*D)

    for b in range(batch):                      # static (B=2) -> unrolled
        r0 = b * T
        q_b = qk[r0:r0 + T, :D]                                 # (T, D) bf16
        k_b = qk[r0:r0 + T, D:]                                 # (T, D) bf16
        vp_b = vp[r0:r0 + T, :]                                 # (T, H*D) bf16

        # All-head scores as one lane-dense (Tq, H*Tk) f32 slab.
        s = jnp.concatenate(
            [jnp.einsum("qd,kd->qk",
                        q_b[:, h * dh:(h + 1) * dh],
                        k_b[:, h * dh:(h + 1) * dh],
                        preferred_element_type=jnp.float32)
             for h in range(heads)], axis=1)                    # (T, H*T) f32

        # torch.softmax(..., dim=1) on (B, Tq, Tk) == softmax over the QUERY
        # axis (axis=0 here).  Batched across heads; f32 math; EUP reciprocal.
        m = jnp.max(s, axis=0, keepdims=True)                   # (1, H*T)
        e = jnp.exp(s - m)
        p = (e * pl.reciprocal(jnp.sum(e, axis=0, keepdims=True), approx=True)
             ).astype(jnp.bfloat16)                             # (T, H*T) bf16

        # Per-head PV with the output projection pre-folded into the values:
        # accumulate the D-wide output in registers (no VMEM concat slab).
        acc = jnp.zeros((T, D), jnp.float32)
        for h in range(heads):
            acc = acc + jnp.dot(p[:, h * T:(h + 1) * T],
                                vp_b[:, h * D:(h + 1) * D],
                                preferred_element_type=jnp.float32)

        o_ref[r0:r0 + T, :] = (acc + bp_ref[...]).astype(o_ref.dtype)


def multi_head_attention(x, params, *, heads):
    """x: (B, T, D) float32. params: PyTorch-layout weights (see _init_params)."""
    B, T, D = x.shape
    dh = D // heads
    inv_norm = 1.0 / (float(dh) ** 0.5)

    # ---- host-side (trace-time) layout plumbing -----------------------------
    # PyTorch Linear stores W as (out_features, in_features); per-head stacks
    # are (H, d, D).  Re-lay as x @ W form, fuse q|k along the output axis,
    # fold 1/sqrt(d) into the Q columns, fold Wp into the V weights per head
    # (in f32, single bf16 cast at the end).
    def to_xw(w):  # (H, d, D) -> (D, H*d)
        return jnp.transpose(w, (2, 0, 1)).reshape(D, heads * dh)

    wqk = jnp.concatenate(
        [to_xw(params["wq"]) * inv_norm, to_xw(params["wk"])],
        axis=1).astype(jnp.bfloat16)                            # (D, 2*D)
    bqk = jnp.concatenate(
        [params["bq"].reshape(-1) * inv_norm,
         params["bk"].reshape(-1)]).reshape(1, 2 * D).astype(jnp.float32)

    # Fold Wp into Wv:  out = sum_h p_h @ (x @ (Wv_h^T @ Wp_h) + bv_h @ Wp_h) + bp
    wp_x = jnp.transpose(params["wp"]).astype(jnp.float32)      # (D, D), x @ W form
    wv_fold, bv_fold = [], []
    for h in range(heads):
        wp_h = wp_x[h * dh:(h + 1) * dh, :]                     # (d, D)
        wv_h = jnp.transpose(params["wv"][h]).astype(jnp.float32)  # (D, d)
        wv_fold.append(wv_h @ wp_h)                             # (D, D)
        bv_fold.append(params["bv"][h].astype(jnp.float32) @ wp_h)  # (D,)
    wvp = jnp.concatenate(wv_fold, axis=1).astype(jnp.bfloat16)    # (D, H*D)
    bvp = jnp.concatenate(bv_fold).reshape(1, heads * D).astype(jnp.float32)
    bp = params["bp"].reshape(1, D).astype(jnp.float32)         # (1, D)

    x2d = x.reshape(B * T, D)

    kernel = functools.partial(_mha_kernel, heads=heads, batch=B, seq=T)
    vmem = pl.BlockSpec(memory_space=pltpu.MemorySpace.VMEM)

    out2d = pl.pallas_call(
        kernel,
        out_shape=jax.ShapeDtypeStruct((B * T, D), x.dtype),
        in_specs=[vmem, vmem, vmem, vmem, vmem, vmem],
        out_specs=vmem,
    )(x2d, wqk, bqk, wvp, bvp, bp)
    return out2d.reshape(B, T, D)


def _reference(x, params, *, heads):
    """Pure-JAX f32 reference mirroring the PyTorch forward (eval mode)."""
    B, T, D = x.shape
    d = D // heads
    norm = float(d) ** 0.5
    outs = []
    for h in range(heads):
        q = x @ params["wq"][h].T + params["bq"][h]
        k = x @ params["wk"][h].T + params["bk"][h]
        v = x @ params["wv"][h].T + params["bv"][h]
        s = jnp.einsum("btd,bsd->bts", q, k) / norm
        p = jax.nn.softmax(s, axis=1)          # dim=1, as in the PyTorch code
        outs.append(jnp.einsum("bts,bsd->btd", p, v))
    cat = jnp.concatenate(outs, axis=-1)
    return cat @ params["wp"].T + params["bp"]


def _init_params(key, dim, heads, dtype=jnp.float32):
    d = dim // heads
    keys = jax.random.split(key, 8)
    scale = 0.1
    return {
        "wq": scale * jax.random.normal(keys[0], (heads, d, dim), dtype),
        "bq": scale * jax.random.normal(keys[1], (heads, d), dtype),
        "wk": scale * jax.random.normal(keys[2], (heads, d, dim), dtype),
        "bk": scale * jax.random.normal(keys[3], (heads, d), dtype),
        "wv": scale * jax.random.normal(keys[4], (heads, d, dim), dtype),
        "bv": scale * jax.random.normal(keys[5], (heads, d), dtype),
        "wp": scale * jax.random.normal(keys[6], (dim, dim), dtype),
        "bp": scale * jax.random.normal(keys[7], (dim,), dtype),
    }


if __name__ == "__main__":
    B, T, DIM, HEADS = 2, 8, 32, 8   # small shapes consistent with the module

    key = jax.random.PRNGKey(0)
    kx, kp = jax.random.split(key)
    x = jax.random.normal(kx, (B, T, DIM), jnp.float32)
    params = _init_params(kp, DIM, HEADS)

    out = multi_head_attention(x, params, heads=HEADS)
    out = jax.block_until_ready(out)

    ref = _reference(x, params, heads=HEADS)
    assert out.shape == (B, T, DIM)
    # bf16 MXU operands (f32 accumulation, f32 softmax) -> bf16-level tolerance.
    max_diff = float(jnp.max(jnp.abs(out - ref)))
    assert jnp.allclose(out, ref, atol=3e-2, rtol=3e-2), (
        f"mismatch vs reference: max |diff| = {max_diff}")

    print("KERNEL_OK")
</pallas_src>

<mosaic_0001>
module attributes {stable_mosaic.version = 11 : i64} {
  func.func @_mha_kernel(%arg0: memref<16x32xf32, #tpu.memory_space<vmem>>, %arg1: memref<32x64xbf16, #tpu.memory_space<vmem>>, %arg2: memref<1x64xf32, #tpu.memory_space<vmem>>, %arg3: memref<32x256xbf16, #tpu.memory_space<vmem>>, %arg4: memref<1x256xf32, #tpu.memory_space<vmem>>, %arg5: memref<1x32xf32, #tpu.memory_space<vmem>>, %arg6: memref<16x32xf32, #tpu.memory_space<vmem>>) attributes {dimension_semantics = [], scalar_prefetch = 0 : i64, scratch_operands = 0 : i64, tpu.core_type = #tpu.core_type<tc>} {
    %c0 = arith.constant 0 : index
    %c0_0 = arith.constant 0 : index
    %0 = vector.load %arg0[%c0, %c0_0] : memref<16x32xf32, #tpu.memory_space<vmem>>, vector<16x32xf32>
    %1 = arith.truncf %0 : vector<16x32xf32> to vector<16x32xbf16>
    %c0_1 = arith.constant 0 : index
    %c0_2 = arith.constant 0 : index
    %2 = vector.load %arg1[%c0_1, %c0_2] : memref<32x64xbf16, #tpu.memory_space<vmem>>, vector<32x64xbf16>
    %cst = arith.constant dense<0.000000e+00> : vector<16x64xf32>
    %3 = tpu.matmul %1, %2, %cst {dimension_numbers = #tpu.dot_dimension_numbers<[1], [0], [0], [1], [0, 0, 1, 1], [], []>} : vector<16x32xbf16>, vector<32x64xbf16>, vector<16x64xf32> -> vector<16x64xf32>
    %c0_3 = arith.constant 0 : index
    %c0_4 = arith.constant 0 : index
    %4 = vector.load %arg2[%c0_3, %c0_4] : memref<1x64xf32, #tpu.memory_space<vmem>>, vector<1x64xf32>
    %5 = vector.broadcast %4 : vector<1x64xf32> to vector<16x64xf32>
    %6 = arith.addf %3, %5 : vector<16x64xf32>
    %7 = arith.truncf %6 : vector<16x64xf32> to vector<16x64xbf16>
    %c0_5 = arith.constant 0 : index
    %c0_6 = arith.constant 0 : index
    %8 = vector.load %arg3[%c0_5, %c0_6] : memref<32x256xbf16, #tpu.memory_space<vmem>>, vector<32x256xbf16>
    %cst_7 = arith.constant dense<0.000000e+00> : vector<16x256xf32>
    %9 = tpu.matmul %1, %8, %cst_7 {dimension_numbers = #tpu.dot_dimension_numbers<[1], [0], [0], [1], [0, 0, 1, 1], [], []>} : vector<16x32xbf16>, vector<32x256xbf16>, vector<16x256xf32> -> vector<16x256xf32>
    %c0_8 = arith.constant 0 : index
    %c0_9 = arith.constant 0 : index
    %10 = vector.load %arg4[%c0_8, %c0_9] : memref<1x256xf32, #tpu.memory_space<vmem>>, vector<1x256xf32>
    %11 = vector.broadcast %10 : vector<1x256xf32> to vector<16x256xf32>
    %12 = arith.addf %9, %11 : vector<16x256xf32>
    %13 = arith.truncf %12 : vector<16x256xf32> to vector<16x256xbf16>
    %14 = vector.extract_strided_slice %7 {offsets = [0, 0], sizes = [8, 32], strides = [1, 1]} : vector<16x64xbf16> to vector<8x32xbf16>
    %15 = vector.extract_strided_slice %7 {offsets = [0, 32], sizes = [8, 32], strides = [1, 1]} : vector<16x64xbf16> to vector<8x32xbf16>
    %16 = vector.extract_strided_slice %13 {offsets = [0, 0], sizes = [8, 256], strides = [1, 1]} : vector<16x256xbf16> to vector<8x256xbf16>
    %17 = vector.extract_strided_slice %14 {offsets = [0, 0], sizes = [8, 4], strides = [1, 1]} : vector<8x32xbf16> to vector<8x4xbf16>
    %18 = vector.extract_strided_slice %15 {offsets = [0, 0], sizes = [8, 4], strides = [1, 1]} : vector<8x32xbf16> to vector<8x4xbf16>
    "tpu.trace_start"() <{level = 10 : i32, message = "qd,kd->qk"}> : () -> ()
    %cst_10 = arith.constant dense<0.000000e+00> : vector<8x8xf32>
    %19 = tpu.matmul %17, %18, %cst_10 {dimension_numbers = #tpu.dot_dimension_numbers<[1], [1], [0], [0], [0, 0, 1, 0], [], []>} : vector<8x4xbf16>, vector<8x4xbf16>, vector<8x8xf32> -> vector<8x8xf32>
    "tpu.trace_stop"() : () -> ()
    %20 = vector.extract_strided_slice %14 {offsets = [0, 4], sizes = [8, 4], strides = [1, 1]} : vector<8x32xbf16> to vector<8x4xbf16>
    %21 = vector.extract_strided_slice %15 {offsets = [0, 4], sizes = [8, 4], strides = [1, 1]} : vector<8x32xbf16> to vector<8x4xbf16>
    "tpu.trace_start"() <{level = 10 : i32, message = "qd,kd->qk"}> : () -> ()
    %cst_11 = arith.constant dense<0.000000e+00> : vector<8x8xf32>
    %22 = tpu.matmul %20, %21, %cst_11 {dimension_numbers = #tpu.dot_dimension_numbers<[1], [1], [0], [0], [0, 0, 1, 0], [], []>} : vector<8x4xbf16>, vector<8x4xbf16>, vector<8x8xf32> -> vector<8x8xf32>
    "tpu.trace_stop"() : () -> ()
    %23 = vector.extract_strided_slice %14 {offsets = [0, 8], sizes = [8, 4], strides = [1, 1]} : vector<8x32xbf16> to vector<8x4xbf16>
    %24 = vector.extract_strided_slice %15 {offsets = [0, 8], sizes = [8, 4], strides = [1, 1]} : vector<8x32xbf16> to vector<8x4xbf16>
    "tpu.trace_start"() <{level = 10 : i32, message = "qd,kd->qk"}> : () -> ()
    %cst_12 = arith.constant dense<0.000000e+00> : vector<8x8xf32>
    %25 = tpu.matmul %23, %24, %cst_12 {dimension_numbers = #tpu.dot_dimension_numbers<[1], [1], [0], [0], [0, 0, 1, 0], [], []>} : vector<8x4xbf16>, vector<8x4xbf16>, vector<8x8xf32> -> vector<8x8xf32>
    "tpu.trace_stop"() : () -> ()
    %26 = vector.extract_strided_slice %14 {offsets = [0, 12], sizes = [8, 4], strides = [1, 1]} : vector<8x32xbf16> to vector<8x4xbf16>
    %27 = vector.extract_strided_slice %15 {offsets = [0, 12], sizes = [8, 4], strides = [1, 1]} : vector<8x32xbf16> to vector<8x4xbf16>
    "tpu.trace_start"() <{level = 10 : i32, message = "qd,kd->qk"}> : () -> ()
    %cst_13 = arith.constant dense<0.000000e+00> : vector<8x8xf32>
    %28 = tpu.matmul %26, %27, %cst_13 {dimension_numbers = #tpu.dot_dimension_numbers<[1], [1], [0], [0], [0, 0, 1, 0], [], []>} : vector<8x4xbf16>, vector<8x4xbf16>, vector<8x8xf32> -> vector<8x8xf32>
    "tpu.trace_stop"() : () -> ()
    %29 = vector.extract_strided_slice %14 {offsets = [0, 16], sizes = [8, 4], strides = [1, 1]} : vector<8x32xbf16> to vector<8x4xbf16>
    %30 = vector.extract_strided_slice %15 {offsets = [0, 16], sizes = [8, 4], strides = [1, 1]} : vector<8x32xbf16> to vector<8x4xbf16>
    "tpu.trace_start"() <{level = 10 : i32, message = "qd,kd->qk"}> : () -> ()
    %cst_14 = arith.constant dense<0.000000e+00> : vector<8x8xf32>
    %31 = tpu.matmul %29, %30, %cst_14 {dimension_numbers = #tpu.dot_dimension_numbers<[1], [1], [0], [0], [0, 0, 1, 0], [], []>} : vector<8x4xbf16>, vector<8x4xbf16>, vector<8x8xf32> -> vector<8x8xf32>
    "tpu.trace_stop"() : () -> ()
    %32 = vector.extract_strided_slice %14 {offsets = [0, 20], sizes = [8, 4], strides = [1, 1]} : vector<8x32xbf16> to vector<8x4xbf16>
    %33 = vector.extract_strided_slice %15 {offsets = [0, 20], sizes = [8, 4], strides = [1, 1]} : vector<8x32xbf16> to vector<8x4xbf16>
    "tpu.trace_start"() <{level = 10 : i32, message = "qd,kd->qk"}> : () -> ()
    %cst_15 = arith.constant dense<0.000000e+00> : vector<8x8xf32>
    %34 = tpu.matmul %32, %33, %cst_15 {dimension_numbers = #tpu.dot_dimension_numbers<[1], [1], [0], [0], [0, 0, 1, 0], [], []>} : vector<8x4xbf16>, vector<8x4xbf16>, vector<8x8xf32> -> vector<8x8xf32>
    "tpu.trace_stop"() : () -> ()
    %35 = vector.extract_strided_slice %14 {offsets = [0, 24], sizes = [8, 4], strides = [1, 1]} : vector<8x32xbf16> to vector<8x4xbf16>
    %36 = vector.extract_strided_slice %15 {offsets = [0, 24], sizes = [8, 4], strides = [1, 1]} : vector<8x32xbf16> to vector<8x4xbf16>
    "tpu.trace_start"() <{level = 10 : i32, message = "qd,kd->qk"}> : () -> ()
    %cst_16 = arith.constant dense<0.000000e+00> : vector<8x8xf32>
    %37 = tpu.matmul %35, %36, %cst_16 {dimension_numbers = #tpu.dot_dimension_numbers<[1], [1], [0], [0], [0, 0, 1, 0], [], []>} : vector<8x4xbf16>, vector<8x4xbf16>, vector<8x8xf32> -> vector<8x8xf32>
    "tpu.trace_stop"() : () -> ()
    %38 = vector.extract_strided_slice %14 {offsets = [0, 28], sizes = [8, 4], strides = [1, 1]} : vector<8x32xbf16> to vector<8x4xbf16>
    %39 = vector.extract_strided_slice %15 {offsets = [0, 28], sizes = [8, 4], strides = [1, 1]} : vector<8x32xbf16> to vector<8x4xbf16>
    "tpu.trace_start"() <{level = 10 : i32, message = "qd,kd->qk"}> : () -> ()
    %cst_17 = arith.constant dense<0.000000e+00> : vector<8x8xf32>
    %40 = tpu.matmul %38, %39, %cst_17 {dimension_numbers = #tpu.dot_dimension_numbers<[1], [1], [0], [0], [0, 0, 1, 0], [], []>} : vector<8x4xbf16>, vector<8x4xbf16>, vector<8x8xf32> -> vector<8x8xf32>
    "tpu.trace_stop"() : () -> ()
    %41 = tpu.concatenate %19, %22, %25, %28, %31, %34, %37, %40 in 1 : vector<8x8xf32>, vector<8x8xf32>, vector<8x8xf32>, vector<8x8xf32>, vector<8x8xf32>, vector<8x8xf32>, vector<8x8xf32>, vector<8x8xf32> -> vector<8x64xf32>
    %cst_18 = arith.constant dense<0xFF800000> : vector<64xf32>
    %42 = vector.multi_reduction <maximumf>, %41, %cst_18 [0] : vector<8x64xf32> to vector<64xf32>
    %43 = vector.shape_cast %42 : vector<64xf32> to vector<1x64xf32>
    %44 = vector.broadcast %43 : vector<1x64xf32> to vector<8x64xf32>
    %45 = arith.subf %41, %44 : vector<8x64xf32>
    %46 = math.exp %45 : vector<8x64xf32>
    %cst_19 = arith.constant dense<0.000000e+00> : vector<64xf32>
    %47 = vector.multi_reduction <add>, %46, %cst_19 [0] : vector<8x64xf32> to vector<64xf32>
    %48 = vector.shape_cast %47 : vector<64xf32> to vector<1x64xf32>
    %49 = tpu.reciprocal %48 {approx = true} : vector<1x64xf32> -> vector<1x64xf32>
    %50 = vector.broadcast %49 : vector<1x64xf32> to vector<8x64xf32>
    %51 = arith.mulf %46, %50 : vector<8x64xf32>
    %52 = arith.truncf %51 : vector<8x64xf32> to vector<8x64xbf16>
    %cst_20 = arith.constant 0.000000e+00 : f32
    %53 = vector.broadcast %cst_20 : f32 to vector<8x32xf32>
    %54 = vector.extract_strided_slice %52 {offsets = [0, 0], sizes = [8, 8], strides = [1, 1]} : vector<8x64xbf16> to vector<8x8xbf16>
    %55 = vector.extract_strided_slice %16 {offsets = [0, 0], sizes = [8, 32], strides = [1, 1]} : vector<8x256xbf16> to vector<8x32xbf16>
    %cst_21 = arith.constant dense<0.000000e+00> : vector<8x32xf32>
    %56 = tpu.matmul %54, %55, %cst_21 {dimension_numbers = #tpu.dot_dimension_numbers<[1], [0], [0], [1], [0, 0, 1, 1], [], []>} : vector<8x8xbf16>, vector<8x32xbf16>, vector<8x32xf32> -> vector<8x32xf32>
    %57 = arith.addf %53, %56 : vector<8x32xf32>
    %58 = vector.extract_strided_slice %52 {offsets = [0, 8], sizes = [8, 8], strides = [1, 1]} : vector<8x64xbf16> to vector<8x8xbf16>
    %59 = vector.extract_strided_slice %16 {offsets = [0, 32], sizes = [8, 32], strides = [1, 1]} : vector<8x256xbf16> to vector<8x32xbf16>
    %cst_22 = arith.constant dense<0.000000e+00> : vector<8x32xf32>
    %60 = tpu.matmul %58, %59, %cst_22 {dimension_numbers = #tpu.dot_dimension_numbers<[1], [0], [0], [1], [0, 0, 1, 1], [], []>} : vector<8x8xbf16>, vector<8x32xbf16>, vector<8x32xf32> -> vector<8x32xf32>
    %61 = arith.addf %57, %60 : vector<8x32xf32>
    %62 = vector.extract_strided_slice %52 {offsets = [0, 16], sizes = [8, 8], strides = [1, 1]} : vector<8x64xbf16> to vector<8x8xbf16>
    %63 = vector.extract_strided_slice %16 {offsets = [0, 64], sizes = [8, 32], strides = [1, 1]} : vector<8x256xbf16> to vector<8x32xbf16>
    %cst_23 = arith.constant dense<0.000000e+00> : vector<8x32xf32>
    %64 = tpu.matmul %62, %63, %cst_23 {dimension_numbers = #tpu.dot_dimension_numbers<[1], [0], [0], [1], [0, 0, 1, 1], [], []>} : vector<8x8xbf16>, vector<8x32xbf16>, vector<8x32xf32> -> vector<8x32xf32>
    %65 = arith.addf %61, %64 : vector<8x32xf32>
    %66 = vector.extract_strided_slice %52 {offsets = [0, 24], sizes = [8, 8], strides = [1, 1]} : vector<8x64xbf16> to vector<8x8xbf16>
    %67 = vector.extract_strided_slice %16 {offsets = [0, 96], sizes = [8, 32], strides = [1, 1]} : vector<8x256xbf16> to vector<8x32xbf16>
    %cst_24 = arith.constant dense<0.000000e+00> : vector<8x32xf32>
    %68 = tpu.matmul %66, %67, %cst_24 {dimension_numbers = #tpu.dot_dimension_numbers<[1], [0], [0], [1], [0, 0, 1, 1], [], []>} : vector<8x8xbf16>, vector<8x32xbf16>, vector<8x32xf32> -> vector<8x32xf32>
    %69 = arith.addf %65, %68 : vector<8x32xf32>
    %70 = vector.extract_strided_slice %52 {offsets = [0, 32], sizes = [8, 8], strides = [1, 1]} : vector<8x64xbf16> to vector<8x8xbf16>
    %71 = vector.extract_strided_slice %16 {offsets = [0, 128], sizes = [8, 32], strides = [1, 1]} : vector<8x256xbf16> to vector<8x32xbf16>
    %cst_25 = arith.constant dense<0.000000e+00> : vector<8x32xf32>
    %72 = tpu.matmul %70, %71, %cst_25 {dimension_numbers = #tpu.dot_dimension_numbers<[1], [0], [0], [1], [0, 0, 1, 1], [], []>} : vector<8x8xbf16>, vector<8x32xbf16>, vector<8x32xf32> -> vector<8x32xf32>
    %73 = arith.addf %69, %72 : vector<8x32xf32>
    %74 = vector.extract_strided_slice %52 {offsets = [0, 40], sizes = [8, 8], strides = [1, 1]} : vector<8x64xbf16> to vector<8x8xbf16>
    %75 = vector.extract_strided_slice %16 {offsets = [0, 160], sizes = [8, 32], strides = [1, 1]} : vector<8x256xbf16> to vector<8x32xbf16>
    %cst_26 = arith.constant dense<0.000000e+00> : vector<8x32xf32>
    %76 = tpu.matmul %74, %75, %cst_26 {dimension_numbers = #tpu.dot_dimension_numbers<[1], [0], [0], [1], [0, 0, 1, 1], [], []>} : vector<8x8xbf16>, vector<8x32xbf16>, vector<8x32xf32> -> vector<8x32xf32>
    %77 = arith.addf %73, %76 : vector<8x32xf32>
    %78 = vector.extract_strided_slice %52 {offsets = [0, 48], sizes = [8, 8], strides = [1, 1]} : vector<8x64xbf16> to vector<8x8xbf16>
    %79 = vector.extract_strided_slice %16 {offsets = [0, 192], sizes = [8, 32], strides = [1, 1]} : vector<8x256xbf16> to vector<8x32xbf16>
    %cst_27 = arith.constant dense<0.000000e+00> : vector<8x32xf32>
    %80 = tpu.matmul %78, %79, %cst_27 {dimension_numbers = #tpu.dot_dimension_numbers<[1], [0], [0], [1], [0, 0, 1, 1], [], []>} : vector<8x8xbf16>, vector<8x32xbf16>, vector<8x32xf32> -> vector<8x32xf32>
    %81 = arith.addf %77, %80 : vector<8x32xf32>
    %82 = vector.extract_strided_slice %52 {offsets = [0, 56], sizes = [8, 8], strides = [1, 1]} : vector<8x64xbf16> to vector<8x8xbf16>
    %83 = vector.extract_strided_slice %16 {offsets = [0, 224], sizes = [8, 32], strides = [1, 1]} : vector<8x256xbf16> to vector<8x32xbf16>
    %cst_28 = arith.constant dense<0.000000e+00> : vector<8x32xf32>
    %84 = tpu.matmul %82, %83, %cst_28 {dimension_numbers = #tpu.dot_dimension_numbers<[1], [0], [0], [1], [0, 0, 1, 1], [], []>} : vector<8x8xbf16>, vector<8x32xbf16>, vector<8x32xf32> -> vector<8x32xf32>
    %85 = arith.addf %81, %84 : vector<8x32xf32>
    %c0_29 = arith.constant 0 : index
    %c0_30 = arith.constant 0 : index
    %86 = vector.load %arg5[%c0_29, %c0_30] : memref<1x32xf32, #tpu.memory_space<vmem>>, vector<1x32xf32>
    %87 = vector.broadcast %86 : vector<1x32xf32> to vector<8x32xf32>
    %88 = arith.addf %85, %87 : vector<8x32xf32>
    %c0_31 = arith.constant 0 : index
    %c0_32 = arith.constant 0 : index
    %89 = vector.load %arg6[%c0_31, %c0_32] : memref<16x32xf32, #tpu.memory_space<vmem>>, vector<8x32xf32>
    tpu.vector_store %arg6[%c0_31, %c0_32], %88 {strides = array<i32>} : memref<16x32xf32, #tpu.memory_space<vmem>>, vector<8x32xf32>,
    %90 = vector.extract_strided_slice %7 {offsets = [8, 0], sizes = [8, 32], strides = [1, 1]} : vector<16x64xbf16> to vector<8x32xbf16>
    %91 = vector.extract_strided_slice %7 {offsets = [8, 32], sizes = [8, 32], strides = [1, 1]} : vector<16x64xbf16> to vector<8x32xbf16>
    %92 = vector.extract_strided_slice %13 {offsets = [8, 0], sizes = [8, 256], strides = [1, 1]} : vector<16x256xbf16> to vector<8x256xbf16>
    %93 = vector.extract_strided_slice %90 {offsets = [0, 0], sizes = [8, 4], strides = [1, 1]} : vector<8x32xbf16> to vector<8x4xbf16>
    %94 = vector.extract_strided_slice %91 {offsets = [0, 0], sizes = [8, 4], strides = [1, 1]} : vector<8x32xbf16> to vector<8x4xbf16>
    "tpu.trace_start"() <{level = 10 : i32, message = "qd,kd->qk"}> : () -> ()
    %cst_33 = arith.constant dense<0.000000e+00> : vector<8x8xf32>
    %95 = tpu.matmul %93, %94, %cst_33 {dimension_numbers = #tpu.dot_dimension_numbers<[1], [1], [0], [0], [0, 0, 1, 0], [], []>} : vector<8x4xbf16>, vector<8x4xbf16>, vector<8x8xf32> -> vector<8x8xf32>
    "tpu.trace_stop"() : () -> ()
    %96 = vector.extract_strided_slice %90 {offsets = [0, 4], sizes = [8, 4], strides = [1, 1]} : vector<8x32xbf16> to vector<8x4xbf16>
    %97 = vector.extract_strided_slice %91 {offsets = [0, 4], sizes = [8, 4], strides = [1, 1]} : vector<8x32xbf16> to vector<8x4xbf16>
    "tpu.trace_start"() <{level = 10 : i32, message = "qd,kd->qk"}> : () -> ()
    %cst_34 = arith.constant dense<0.000000e+00> : vector<8x8xf32>
    %98 = tpu.matmul %96, %97, %cst_34 {dimension_numbers = #tpu.dot_dimension_numbers<[1], [1], [0], [0], [0, 0, 1, 0], [], []>} : vector<8x4xbf16>, vector<8x4xbf16>, vector<8x8xf32> -> vector<8x8xf32>
    "tpu.trace_stop"() : () -> ()
    %99 = vector.extract_strided_slice %90 {offsets = [0, 8], sizes = [8, 4], strides = [1, 1]} : vector<8x32xbf16> to vector<8x4xbf16>
    %100 = vector.extract_strided_slice %91 {offsets = [0, 8], sizes = [8, 4], strides = [1, 1]} : vector<8x32xbf16> to vector<8x4xbf16>
    "tpu.trace_start"() <{level = 10 : i32, message = "qd,kd->qk"}> : () -> ()
    %cst_35 = arith.constant dense<0.000000e+00> : vector<8x8xf32>
    %101 = tpu.matmul %99, %100, %cst_35 {dimension_numbers = #tpu.dot_dimension_numbers<[1], [1], [0], [0], [0, 0, 1, 0], [], []>} : vector<8x4xbf16>, vector<8x4xbf16>, vector<8x8xf32> -> vector<8x8xf32>
    "tpu.trace_stop"() : () -> ()
    %102 = vector.extract_strided_slice %90 {offsets = [0, 12], sizes = [8, 4], strides = [1, 1]} : vector<8x32xbf16> to vector<8x4xbf16>
    %103 = vector.extract_strided_slice %91 {offsets = [0, 12], sizes = [8, 4], strides = [1, 1]} : vector<8x32xbf16> to vector<8x4xbf16>
    "tpu.trace_start"() <{level = 10 : i32, message = "qd,kd->qk"}> : () -> ()
    %cst_36 = arith.constant dense<0.000000e+00> : vector<8x8xf32>
    %104 = tpu.matmul %102, %103, %cst_36 {dimension_numbers = #tpu.dot_dimension_numbers<[1], [1], [0], [0], [0, 0, 1, 0], [], []>} : vector<8x4xbf16>, vector<8x4xbf16>, vector<8x8xf32> -> vector<8x8xf32>
    "tpu.trace_stop"() : () -> ()
    %105 = vector.extract_strided_slice %90 {offsets = [0, 16], sizes = [8, 4], strides = [1, 1]} : vector<8x32xbf16> to vector<8x4xbf16>
    %106 = vector.extract_strided_slice %91 {offsets = [0, 16], sizes = [8, 4], strides = [1, 1]} : vector<8x32xbf16> to vector<8x4xbf16>
    "tpu.trace_start"() <{level = 10 : i32, message = "qd,kd->qk"}> : () -> ()
    %cst_37 = arith.constant dense<0.000000e+00> : vector<8x8xf32>
    %107 = tpu.matmul %105, %106, %cst_37 {dimension_numbers = #tpu.dot_dimension_numbers<[1], [1], [0], [0], [0, 0, 1, 0], [], []>} : vector<8x4xbf16>, vector<8x4xbf16>, vector<8x8xf32> -> vector<8x8xf32>
    "tpu.trace_stop"() : () -> ()
    %108 = vector.extract_strided_slice %90 {offsets = [0, 20], sizes = [8, 4], strides = [1, 1]} : vector<8x32xbf16> to vector<8x4xbf16>
    %109 = vector.extract_strided_slice %91 {offsets = [0, 20], sizes = [8, 4], strides = [1, 1]} : vector<8x32xbf16> to vector<8x4xbf16>
    "tpu.trace_start"() <{level = 10 : i32, message = "qd,kd->qk"}> : () -> ()
    %cst_38 = arith.constant dense<0.000000e+00> : vector<8x8xf32>
    %110 = tpu.matmul %108, %109, %cst_38 {dimension_numbers = #tpu.dot_dimension_numbers<[1], [1], [0], [0], [0, 0, 1, 0], [], []>} : vector<8x4xbf16>, vector<8x4xbf16>, vector<8x8xf32> -> vector<8x8xf32>
    "tpu.trace_stop"() : () -> ()
    %111 = vector.extract_strided_slice %90 {offsets = [0, 24], sizes = [8, 4], strides = [1, 1]} : vector<8x32xbf16> to vector<8x4xbf16>
    %112 = vector.extract_strided_slice %91 {offsets = [0, 24], sizes = [8, 4], strides = [1, 1]} : vector<8x32xbf16> to vector<8x4xbf16>
    "tpu.trace_start"() <{level = 10 : i32, message = "qd,kd->qk"}> : () -> ()
    %cst_39 = arith.constant dense<0.000000e+00> : vector<8x8xf32>
    %113 = tpu.matmul %111, %112, %cst_39 {dimension_numbers = #tpu.dot_dimension_numbers<[1], [1], [0], [0], [0, 0, 1, 0], [], []>} : vector<8x4xbf16>, vector<8x4xbf16>, vector<8x8xf32> -> vector<8x8xf32>
    "tpu.trace_stop"() : () -> ()
    %114 = vector.extract_strided_slice %90 {offsets = [0, 28], sizes = [8, 4], strides = [1, 1]} : vector<8x32xbf16> to vector<8x4xbf16>
    %115 = vector.extract_strided_slice %91 {offsets = [0, 28], sizes = [8, 4], strides = [1, 1]} : vector<8x32xbf16> to vector<8x4xbf16>
    "tpu.trace_start"() <{level = 10 : i32, message = "qd,kd->qk"}> : () -> ()
    %cst_40 = arith.constant dense<0.000000e+00> : vector<8x8xf32>
    %116 = tpu.matmul %114, %115, %cst_40 {dimension_numbers = #tpu.dot_dimension_numbers<[1], [1], [0], [0], [0, 0, 1, 0], [], []>} : vector<8x4xbf16>, vector<8x4xbf16>, vector<8x8xf32> -> vector<8x8xf32>
    "tpu.trace_stop"() : () -> ()
    %117 = tpu.concatenate %95, %98, %101, %104, %107, %110, %113, %116 in 1 : vector<8x8xf32>, vector<8x8xf32>, vector<8x8xf32>, vector<8x8xf32>, vector<8x8xf32>, vector<8x8xf32>, vector<8x8xf32>, vector<8x8xf32> -> vector<8x64xf32>
    %cst_41 = arith.constant dense<0xFF800000> : vector<64xf32>
    %118 = vector.multi_reduction <maximumf>, %117, %cst_41 [0] : vector<8x64xf32> to vector<64xf32>
    %119 = vector.shape_cast %118 : vector<64xf32> to vector<1x64xf32>
    %120 = vector.broadcast %119 : vector<1x64xf32> to vector<8x64xf32>
    %121 = arith.subf %117, %120 : vector<8x64xf32>
    %122 = math.exp %121 : vector<8x64xf32>
    %cst_42 = arith.constant dense<0.000000e+00> : vector<64xf32>
    %123 = vector.multi_reduction <add>, %122, %cst_42 [0] : vector<8x64xf32> to vector<64xf32>
    %124 = vector.shape_cast %123 : vector<64xf32> to vector<1x64xf32>
    %125 = tpu.reciprocal %124 {approx = true} : vector<1x64xf32> -> vector<1x64xf32>
    %126 = vector.broadcast %125 : vector<1x64xf32> to vector<8x64xf32>
    %127 = arith.mulf %122, %126 : vector<8x64xf32>
    %128 = arith.truncf %127 : vector<8x64xf32> to vector<8x64xbf16>
    %cst_43 = arith.constant 0.000000e+00 : f32
    %129 = vector.broadcast %cst_43 : f32 to vector<8x32xf32>
    %130 = vector.extract_strided_slice %128 {offsets = [0, 0], sizes = [8, 8], strides = [1, 1]} : vector<8x64xbf16> to vector<8x8xbf16>
    %131 = vector.extract_strided_slice %92 {offsets = [0, 0], sizes = [8, 32], strides = [1, 1]} : vector<8x256xbf16> to vector<8x32xbf16>
    %cst_44 = arith.constant dense<0.000000e+00> : vector<8x32xf32>
    %132 = tpu.matmul %130, %131, %cst_44 {dimension_numbers = #tpu.dot_dimension_numbers<[1], [0], [0], [1], [0, 0, 1, 1], [], []>} : vector<8x8xbf16>, vector<8x32xbf16>, vector<8x32xf32> -> vector<8x32xf32>
    %133 = arith.addf %129, %132 : vector<8x32xf32>
    %134 = vector.extract_strided_slice %128 {offsets = [0, 8], sizes = [8, 8], strides = [1, 1]} : vector<8x64xbf16> to vector<8x8xbf16>
    %135 = vector.extract_strided_slice %92 {offsets = [0, 32], sizes = [8, 32], strides = [1, 1]} : vector<8x256xbf16> to vector<8x32xbf16>
    %cst_45 = arith.constant dense<0.000000e+00> : vector<8x32xf32>
    %136 = tpu.matmul %134, %135, %cst_45 {dimension_numbers = #tpu.dot_dimension_numbers<[1], [0], [0], [1], [0, 0, 1, 1], [], []>} : vector<8x8xbf16>, vector<8x32xbf16>, vector<8x32xf32> -> vector<8x32xf32>
    %137 = arith.addf %133, %136 : vector<8x32xf32>
    %138 = vector.extract_strided_slice %128 {offsets = [0, 16], sizes = [8, 8], strides = [1, 1]} : vector<8x64xbf16> to vector<8x8xbf16>
    %139 = vector.extract_strided_slice %92 {offsets = [0, 64], sizes = [8, 32], strides = [1, 1]} : vector<8x256xbf16> to vector<8x32xbf16>
    %cst_46 = arith.constant dense<0.000000e+00> : vector<8x32xf32>
    %140 = tpu.matmul %138, %139, %cst_46 {dimension_numbers = #tpu.dot_dimension_numbers<[1], [0], [0], [1], [0, 0, 1, 1], [], []>} : vector<8x8xbf16>, vector<8x32xbf16>, vector<8x32xf32> -> vector<8x32xf32>
    %141 = arith.addf %137, %140 : vector<8x32xf32>
    %142 = vector.extract_strided_slice %128 {offsets = [0, 24], sizes = [8, 8], strides = [1, 1]} : vector<8x64xbf16> to vector<8x8xbf16>
    %143 = vector.extract_strided_slice %92 {offsets = [0, 96], sizes = [8, 32], strides = [1, 1]} : vector<8x256xbf16> to vector<8x32xbf16>
    %cst_47 = arith.constant dense<0.000000e+00> : vector<8x32xf32>
    %144 = tpu.matmul %142, %143, %cst_47 {dimension_numbers = #tpu.dot_dimension_numbers<[1], [0], [0], [1], [0, 0, 1, 1], [], []>} : vector<8x8xbf16>, vector<8x32xbf16>, vector<8x32xf32> -> vector<8x32xf32>
    %145 = arith.addf %141, %144 : vector<8x32xf32>
    %146 = vector.extract_strided_slice %128 {offsets = [0, 32], sizes = [8, 8], strides = [1, 1]} : vector<8x64xbf16> to vector<8x8xbf16>
    %147 = vector.extract_strided_slice %92 {offsets = [0, 128], sizes = [8, 32], strides = [1, 1]} : vector<8x256xbf16> to vector<8x32xbf16>
    %cst_48 = arith.constant dense<0.000000e+00> : vector<8x32xf32>
    %148 = tpu.matmul %146, %147, %cst_48 {dimension_numbers = #tpu.dot_dimension_numbers<[1], [0], [0], [1], [0, 0, 1, 1], [], []>} : vector<8x8xbf16>, vector<8x32xbf16>, vector<8x32xf32> -> vector<8x32xf32>
    %149 = arith.addf %145, %148 : vector<8x32xf32>
    %150 = vector.extract_strided_slice %128 {offsets = [0, 40], sizes = [8, 8], strides = [1, 1]} : vector<8x64xbf16> to vector<8x8xbf16>
    %151 = vector.extract_strided_slice %92 {offsets = [0, 160], sizes = [8, 32], strides = [1, 1]} : vector<8x256xbf16> to vector<8x32xbf16>
    %cst_49 = arith.constant dense<0.000000e+00> : vector<8x32xf32>
    %152 = tpu.matmul %150, %151, %cst_49 {dimension_numbers = #tpu.dot_dimension_numbers<[1], [0], [0], [1], [0, 0, 1, 1], [], []>} : vector<8x8xbf16>, vector<8x32xbf16>, vector<8x32xf32> -> vector<8x32xf32>
    %153 = arith.addf %149, %152 : vector<8x32xf32>
    %154 = vector.extract_strided_slice %128 {offsets = [0, 48], sizes = [8, 8], strides = [1, 1]} : vector<8x64xbf16> to vector<8x8xbf16>
    %155 = vector.extract_strided_slice %92 {offsets = [0, 192], sizes = [8, 32], strides = [1, 1]} : vector<8x256xbf16> to vector<8x32xbf16>
    %cst_50 = arith.constant dense<0.000000e+00> : vector<8x32xf32>
    %156 = tpu.matmul %154, %155, %cst_50 {dimension_numbers = #tpu.dot_dimension_numbers<[1], [0], [0], [1], [0, 0, 1, 1], [], []>} : vector<8x8xbf16>, vector<8x32xbf16>, vector<8x32xf32> -> vector<8x32xf32>
    %157 = arith.addf %153, %156 : vector<8x32xf32>
    %158 = vector.extract_strided_slice %128 {offsets = [0, 56], sizes = [8, 8], strides = [1, 1]} : vector<8x64xbf16> to vector<8x8xbf16>
    %159 = vector.extract_strided_slice %92 {offsets = [0, 224], sizes = [8, 32], strides = [1, 1]} : vector<8x256xbf16> to vector<8x32xbf16>
    %cst_51 = arith.constant dense<0.000000e+00> : vector<8x32xf32>
    %160 = tpu.matmul %158, %159, %cst_51 {dimension_numbers = #tpu.dot_dimension_numbers<[1], [0], [0], [1], [0, 0, 1, 1], [], []>} : vector<8x8xbf16>, vector<8x32xbf16>, vector<8x32xf32> -> vector<8x32xf32>
    %161 = arith.addf %157, %160 : vector<8x32xf32>
    %c0_52 = arith.constant 0 : index
    %c0_53 = arith.constant 0 : index
    %162 = vector.load %arg5[%c0_52, %c0_53] : memref<1x32xf32, #tpu.memory_space<vmem>>, vector<1x32xf32>
    %163 = vector.broadcast %162 : vector<1x32xf32> to vector<8x32xf32>
    %164 = arith.addf %161, %163 : vector<8x32xf32>
    %c8 = arith.constant 8 : index
    %c0_54 = arith.constant 0 : index
    %165 = vector.load %arg6[%c8, %c0_54] : memref<16x32xf32, #tpu.memory_space<vmem>>, vector<8x32xf32>
    tpu.vector_store %arg6[%c8, %c0_54], %164 {strides = array<i32>} : memref<16x32xf32, #tpu.memory_space<vmem>>, vector<8x32xf32>,
    return
  }
}

</mosaic_0001>

<llo_original>
// kernel: tpu_custom_call.1
$region0: #{tpu_custom_call.1}
  #allocation0 [shape = 'u32[]', space=smem, size = 0x4, offset = 0x4, fixed_abs, tag = 'smem constant byte address 0x4 - core index']
  #allocation1 [shape = 'u32[144,128]{1,0:T(1,128)}', space=vmem, size = 0x12000, scoped, tag = 'internal scratch']
  %s0 = inlined_call_operand.hbm [shape: f32[16,32], index: 0, kind: input, shape index: {}]
  %s1 = inlined_call_operand.hbm [shape: bf16[32,64], index: 1, kind: input, shape index: {}]
  %s2 = inlined_call_operand.vmem [shape: f32[1,64], index: 2, kind: input, shape index: {}]
  %s3 = inlined_call_operand.hbm [shape: bf16[32,256], index: 3, kind: input, shape index: {}]
  %s4 = inlined_call_operand.vmem [shape: f32[1,256], index: 4, kind: input, shape index: {}]
  %s5 = inlined_call_operand.vmem [shape: f32[1,32], index: 5, kind: input, shape index: {}]
  %s6 = inlined_call_operand.hbm [shape: f32[16,32], index: 6, kind: output, shape index: {}]
  %s7 = sld [smem:[#allocation0]]
  $region46: #{tpu_custom_call.1} parent=0
    _
  %s9 = ssub.s32 1, %s7
  %s10 = scalar_select 0, %s9, %s7
  $region1: #{tpu_custom_call.1} parent=0
    #allocation2 [shape = 'u8[8192]{0}', space=vmem, size = 0x2000, scoped, tag = 'input window, operand 0, single buffered']
    #allocation3 [shape = 's32[1]{0}', space=sflag, size = 0x4, scoped, tag = 'scoped memory for tpu_custom_call.1']
    #allocation4 [shape = 's32[1]{0}', space=sflag, size = 0x4, scoped, tag = 'scoped memory for tpu_custom_call.1']
    #allocation5 [shape = 'u8[8192]{0}', space=vmem, size = 0x2000, scoped, tag = 'input window, operand 1, single buffered']
    #allocation6 [shape = 's32[1]{0}', space=sflag, size = 0x4, scoped, tag = 'scoped memory for tpu_custom_call.1']
    #allocation7 [shape = 'u8[16384]{0}', space=vmem, size = 0x4000, scoped, tag = 'input window, operand 3, single buffered']
    #allocation8 [shape = 'u8[8192]{0}', space=vmem, size = 0x2000, scoped, tag = 'output window, operand 0, single buffered']
    %11 = vsyncpa [#allocation3], 0
    %12 = vsyncpa [#allocation6], 0
    %13 = vsyncpa [#allocation4], 0
    // Predicated region
    $region2: #{tpu_custom_call.1} parent=1 // pred_check
      _
    $region3: #{tpu_custom_call.1} parent=1 // pred_check_branch
      %15 = sbr.rel (0) target = $region5
    $region4: #{tpu_custom_call.1} parent=1 // pred_region
      %s17 = ssub.s32 256, 256
      %18 = vsyncadd [#allocation3], %s17
      %s19 = sshll.u32 [#allocation2], 4
      %s20 = int_to_ptr.vmem [resolvable:$true] %s19
      %25 = dma.hbm_to_vmem [thread:$0]  %s0, 256, %s20, [#allocation3], 128, 128, 8
    $region5: #{tpu_custom_call.1} parent=1 // pred_fallthru
      _
    // Predicated region
    $region6: #{tpu_custom_call.1} parent=1 // pred_check
      _
    $region7: #{tpu_custom_call.1} parent=1 // pred_check_branch
      %27 = sbr.rel (0) target = $region9
    $region8: #{tpu_custom_call.1} parent=1 // pred_region
      %s29 = ssub.s32 256, 256
      %30 = vsyncadd [#allocation6], %s29
      %s31 = sshll.u32 [#allocation5], 4
      %s32 = int_to_ptr.vmem [resolvable:$true] %s31
      %37 = dma.hbm_to_vmem [thread:$0]  %s1, 256, %s32, [#allocation6], 64, 64, 4
    $region9: #{tpu_custom_call.1} parent=1 // pred_fallthru
      _
    // Predicated region
    $region10: #{tpu_custom_call.1} parent=1 // pred_check
      _
    $region11: #{tpu_custom_call.1} parent=1 // pred_check_branch
      %39 = sbr.rel (0) target = $region13
    $region12: #{tpu_custom_call.1} parent=1 // pred_region
      _
    $region13: #{tpu_custom_call.1} parent=1 // pred_fallthru
      _
    // Predicated region
    $region14: #{tpu_custom_call.1} parent=1 // pred_check
      _
    $region15: #{tpu_custom_call.1} parent=1 // pred_check_branch
      %41 = sbr.rel (0) target = $region17
    $region16: #{tpu_custom_call.1} parent=1 // pred_region
      %s43 = ssub.s32 512, 512
      %44 = vsyncadd [#allocation6], %s43
      %s45 = sshll.u32 [#allocation7], 4
      %s46 = int_to_ptr.vmem [resolvable:$true] %s45
      %51 = dma.hbm_to_vmem [thread:$0]  %s3, 512, %s46, [#allocation6], 128, 128, 8
    $region17: #{tpu_custom_call.1} parent=1 // pred_fallthru
      _
    // Predicated region
    $region18: #{tpu_custom_call.1} parent=1 // pred_check
      _
    $region19: #{tpu_custom_call.1} parent=1 // pred_check_branch
      %53 = sbr.rel (0) target = $region21
    $region20: #{tpu_custom_call.1} parent=1 // pred_region
      _
    $region21: #{tpu_custom_call.1} parent=1 // pred_fallthru
      _
    // Predicated region
    $region22: #{tpu_custom_call.1} parent=1 // pred_check
      _
    $region23: #{tpu_custom_call.1} parent=1 // pred_check_branch
      %55 = sbr.rel (0) target = $region25
    $region24: #{tpu_custom_call.1} parent=1 // pred_region
      _
    $region25: #{tpu_custom_call.1} parent=1 // pred_fallthru
      _
    // Predicated region
    $region26: #{tpu_custom_call.1} parent=1 // pred_check
      _
    $region27: #{tpu_custom_call.1} parent=1 // pred_check_branch
      %57 = sbr.rel (0) target = $region29
    $region28: #{tpu_custom_call.1} parent=1 // pred_region
      %58 = dma.done [#allocation3], 256
    $region29: #{tpu_custom_call.1} parent=1 // pred_fallthru
      _
    // Predicated region
    $region30: #{tpu_custom_call.1} parent=1 // pred_check
      _
    $region31: #{tpu_custom_call.1} parent=1 // pred_check_branch
      %60 = sbr.rel (0) target = $region33
    $region32: #{tpu_custom_call.1} parent=1 // pred_region
      %61 = dma.done [#allocation6], 256
    $region33: #{tpu_custom_call.1} parent=1 // pred_fallthru
      _
    // Predicated region
    $region34: #{tpu_custom_call.1} parent=1 // pred_check
      _
    $region35: #{tpu_custom_call.1} parent=1 // pred_check_branch
      %63 = sbr.rel (0) target = $region37
    $region36: #{tpu_custom_call.1} parent=1 // pred_region
      %64 = dma.done [#allocation6], 512
    $region37: #{tpu_custom_call.1} parent=1 // pred_fallthru
      _
    %v66 = vld [vmem:[#allocation2] sm:$0xff]
    %v67 = vld [vmem:[#allocation2 + $0x8] sm:$0xff]
    %v68 = vpack.c.bf16 %v67, %v66
    %v69 = vld [vmem:[#allocation5] sm:$0xf]
    %v70 = vld [vmem:[#allocation5 + $0x4] sm:$0xf]
    %v71 = vld [vmem:[#allocation5 + $0x8] sm:$0xf]
    %v72 = vld [vmem:[#allocation5 + $0xc] sm:$0xf]
    %v73 = vld [vmem:[%s2] sm:$0x1]
    %v75 = vlaneseq
    %v76 = vshrl.u32 %v75, 7
    %v77 = vsub.s32 0, %v76
    %v78 = vrot.slane %v73, %v77
    %v84 = vunpack.c.l.b16 %v69
    %v85 = vunpack.c.l.b16 %v70
    %v86 = vunpack.c.l.b16 %v71
    %v87 = vunpack.c.l.b16 %v72
    %v88 = vpack.c.b16 %v85, %v84
    %v89 = vpack.c.b16 %v87, %v86
    %vm92 = vcmask 261120
    %v94 = vsel %vm92, %v68, 0
    %96 = vmatprep.subr.bf16.mxu0 0
    %97 = vmatpush1.bf16.msra.mxu0 %v88
    %98 = vmatprep.subr.bf16.mxu0 0
    %99 = vmatpush1.bf16.msra.mxu0 %v89
    %100 = vmatprep.subr.bf16.mxu0 0
    %101 = vmatpush1.bf16.msra.mxu0 0
    %102 = vmatprep.subr.bf16.mxu0 0
    %103 = vmatpush1.bf16.msra.mxu0 0
    %104 = vmatprep.subr.bf16.mxu0 0
    %105 = vmatpush1.bf16.msra.mxu0 0
    %106 = vmatprep.subr.bf16.mxu0 0
    %107 = vmatpush1.bf16.msra.mxu0 0
    %108 = vmatprep.subr.bf16.mxu0 0
    %109 = vmatpush1.bf16.msra.mxu0 0
    %110 = vmatprep.subr.bf16.mxu0 0
    %111 = vmatpush1.bf16.msra.mxu0 0
    %112 = vmatprep.subr.bf16.mxu0 0
    %113 = vmatpush1.bf16.msra.mxu0 0
    %114 = vmatprep.subr.bf16.mxu0 0
    %115 = vmatpush1.bf16.msra.mxu0 0
    %116 = vmatprep.subr.bf16.mxu0 0
    %117 = vmatpush1.bf16.msra.mxu0 0
    %118 = vmatprep.subr.bf16.mxu0 0
    %119 = vmatpush1.bf16.msra.mxu0 0
    %120 = vmatprep.subr.bf16.mxu0 0
    %121 = vmatpush1.bf16.msra.mxu0 0
    %122 = vmatprep.subr.bf16.mxu0 0
    %123 = vmatpush1.bf16.msra.mxu0 0
    %124 = vmatprep.subr.bf16.mxu0 0
    %125 = vmatpush1.bf16.msra.mxu0 0
    %126 = vmatprep.subr.bf16.mxu0 0
    %127 = vmatpush1.bf16.msra.mxu0 0
    %128 = vmatprep.mubr.bf16.mxu0 0
    %129 = vmatmul.mubr.bf16.gmra.mrb[0].mxu0 %v94
    %v130 = vpop.f32.mrb[0].mxu0
    %v131 = vadd.f32 %v78, %v130
    %v132 = vpop.f32.mrb[0].mxu0
    %v133 = vpop.f32.mrb[0].mxu0
    %v134 = vadd.f32 %v78, %v133
    %v135 = vpop.f32.mrb[0].mxu0
    %136 = vdwg.mxu0
    %v137 = vpack.c.bf16 %v134, %v131
    %v138 = vld [vmem:[#allocation7] sm:$0xff]
    %v139 = vld [vmem:[#allocation7 + $0x8] sm:$0xff]
    %v140 = vld [vmem:[#allocation7 + $0x10] sm:$0xff]
    %v141 = vld [vmem:[#allocation7 + $0x18] sm:$0xff]
    %v142 = vld [vmem:[%s4] sm:$0x3]
    %v144 = vlaneseq
    %v145 = vshrl.u32 %v144, 7
    %v146 = vsub.s32 0, %v145
    %v147 = vrot.slane %v142, %v146
    %v148 = vlaneseq
    %v149 = vshrl.u32 %v148, 7
    %v150 = vsub.s32 1, %v149
    %v151 = vrot.slane %v142, %v150
    %v158 = vunpack.c.l.b16 %v138
    %v159 = vunpack.c.h.b16 %v138
    %v160 = vunpack.c.l.b16 %v139
    %v161 = vunpack.c.h.b16 %v139
    %v162 = vunpack.c.l.b16 %v140
    %v163 = vunpack.c.h.b16 %v140
    %v164 = vunpack.c.l.b16 %v141
    %v165 = vunpack.c.h.b16 %v141
    %v166 = vpack.c.b16 %v160, %v158
    %v167 = vpack.c.b16 %v161, %v159
    %v168 = vpack.c.b16 %v164, %v162
    %v169 = vpack.c.b16 %v165, %v163
    %174 = vmatprep.subr.bf16.mxu0 %v167
    %175 = vmatpush1.bf16.msra.mxu0 %v166
    %176 = vmatprep.subr.bf16.mxu0 %v169
    %177 = vmatpush1.bf16.msra.mxu0 %v168
    %178 = vmatprep.subr.bf16.mxu0 0
    %179 = vmatpush1.bf16.msra.mxu0 0
    %180 = vmatprep.subr.bf16.mxu0 0
    %181 = vmatpush1.bf16.msra.mxu0 0
    %182 = vmatprep.subr.bf16.mxu0 0
    %183 = vmatpush1.bf16.msra.mxu0 0
    %184 = vmatprep.subr.bf16.mxu0 0
    %185 = vmatpush1.bf16.msra.mxu0 0
    %186 = vmatprep.subr.bf16.mxu0 0
    %187 = vmatpush1.bf16.msra.mxu0 0
    %188 = vmatprep.subr.bf16.mxu0 0
    %189 = vmatpush1.bf16.msra.mxu0 0
    %190 = vmatprep.subr.bf16.mxu0 0
    %191 = vmatpush1.bf16.msra.mxu0 0
    %192 = vmatprep.subr.bf16.mxu0 0
    %193 = vmatpush1.bf16.msra.mxu0 0
    %194 = vmatprep.subr.bf16.mxu0 0
    %195 = vmatpush1.bf16.msra.mxu0 0
    %196 = vmatprep.subr.bf16.mxu0 0
    %197 = vmatpush1.bf16.msra.mxu0 0
    %198 = vmatprep.subr.bf16.mxu0 0
    %199 = vmatpush1.bf16.msra.mxu0 0
    %200 = vmatprep.subr.bf16.mxu0 0
    %201 = vmatpush1.bf16.msra.mxu0 0
    %202 = vmatprep.subr.bf16.mxu0 0
    %203 = vmatpush1.bf16.msra.mxu0 0
    %204 = vmatprep.subr.bf16.mxu0 0
    %205 = vmatpush1.bf16.msra.mxu0 0
    %206 = vmatprep.mubr.bf16.mxu0 0
    %207 = vmatmul.mubr.bf16.gmra.mrb[0].mxu0 %v94
    %v208 = vpop.f32.mrb[0].mxu0
    %v209 = vadd.f32 %v147, %v208
    %v210 = vpop.f32.mrb[0].mxu0
    %v211 = vadd.f32 %v151, %v210
    %v212 = vpop.f32.mrb[0].mxu0
    %v213 = vadd.f32 %v147, %v212
    %v214 = vpop.f32.mrb[0].mxu0
    %v215 = vadd.f32 %v151, %v214
    %216 = vdwg.mxu0
    %v217 = vpack.c.bf16 %v213, %v209
    %v218 = vpack.c.bf16 %v215, %v211
    %220 = vrot.lane.b32.xlu0 %v137, 96
    %v221 = vpop.permute.xlu0 %220
    %vm222 = vcmask 31744
    %v224 = vsel %vm222, %v137, 0
    %v227 = vsel %vm222, %v221, 0
    %229 = vmatprep.subr.bf16.mxu0 0
    %230 = vmatpush1.bf16.xpose.msra.mxu0 %v227
    %231 = vmatprep.subr.bf16.mxu0 0
    %232 = vmatpush1.bf16.xpose.msra.mxu0 0
    %233 = vmatprep.subr.bf16.mxu0 0
    %234 = vmatpush1.bf16.xpose.msra.mxu0 0
    %235 = vmatprep.subr.bf16.mxu0 0
    %236 = vmatpush1.bf16.xpose.msra.mxu0 0
    %237 = vmatprep.subr.bf16.mxu0 0
    %238 = vmatpush1.bf16.xpose.msra.mxu0 0
    %239 = vmatprep.subr.bf16.mxu0 0
    %240 = vmatpush1.bf16.xpose.msra.mxu0 0
    %241 = vmatprep.subr.bf16.mxu0 0
    %242 = vmatpush1.bf16.xpose.msra.mxu0 0
    %243 = vmatprep.subr.bf16.mxu0 0
    %244 = vmatpush1.bf16.xpose.msra.mxu0 0
    %245 = vmatprep.subr.bf16.mxu0 0
    %246 = vmatpush1.bf16.xpose.msra.mxu0 0
    %247 = vmatprep.subr.bf16.mxu0 0
    %248 = vmatpush1.bf16.xpose.msra.mxu0 0
    %249 = vmatprep.subr.bf16.mxu0 0
    %250 = vmatpush1.bf16.xpose.msra.mxu0 0
    %251 = vmatprep.subr.bf16.mxu0 0
    %252 = vmatpush1.bf16.xpose.msra.mxu0 0
    %253 = vmatprep.subr.bf16.mxu0 0
    %254 = vmatpush1.bf16.xpose.msra.mxu0 0
    %255 = vmatprep.subr.bf16.mxu0 0
    %256 = vmatpush1.bf16.xpose.msra.mxu0 0
    %257 = vmatprep.subr.bf16.mxu0 0
    %258 = vmatpush1.bf16.xpose.msra.mxu0 0
    %259 = vmatprep.subr.bf16.mxu0 0
    %260 = vmatpush1.bf16.xpose.msra.mxu0 0
    %261 = vmatprep.mubr.bf16.mxu0 0
    %262 = vmatmul.mubr.bf16.gmra.mrb[0].mxu0 %v224
    %v263 = vpop.f32.mrb[0].mxu0
    %v264 = vadd.f32 0.0, %v263
    %v265 = vpop.f32.mrb[0].mxu0
    %v266 = vpop.f32.mrb[0].mxu0
    %v267 = vpop.f32.mrb[0].mxu0
    %268 = vdwg.mxu0
    %269 = vrot.lane.b32.xlu0 %v137, 124
    %v270 = vpop.permute.xlu0 %269
    %271 = vrot.lane.b32.xlu0 %v137, 92
    %v272 = vpop.permute.xlu0 %271
    %v274 = vsel %vm222, %v270, 0
    %v277 = vsel %vm222, %v272, 0
    %279 = vmatprep.subr.bf16.mxu0 0
    %280 = vmatpush1.bf16.xpose.msra.mxu0 %v277
    %281 = vmatprep.subr.bf16.mxu0 0
    %282 = vmatpush1.bf16.xpose.msra.mxu0 0
    %283 = vmatprep.subr.bf16.mxu0 0
    %284 = vmatpush1.bf16.xpose.msra.mxu0 0
    %285 = vmatprep.subr.bf16.mxu0 0
    %286 = vmatpush1.bf16.xpose.msra.mxu0 0
    %287 = vmatprep.subr.bf16.mxu0 0
    %288 = vmatpush1.bf16.xpose.msra.mxu0 0
    %289 = vmatprep.subr.bf16.mxu0 0
    %290 = vmatpush1.bf16.xpose.msra.mxu0 0
    %291 = vmatprep.subr.bf16.mxu0 0
    %292 = vmatpush1.bf16.xpose.msra.mxu0 0
    %293 = vmatprep.subr.bf16.mxu0 0
    %294 = vmatpush1.bf16.xpose.msra.mxu0 0
    %295 = vmatprep.subr.bf16.mxu0 0
    %296 = vmatpush1.bf16.xpose.msra.mxu0 0
    %297 = vmatprep.subr.bf16.mxu0 0
    %298 = vmatpush1.bf16.xpose.msra.mxu0 0
    %299 = vmatprep.subr.bf16.mxu0 0
    %300 = vmatpush1.bf16.xpose.msra.mxu0 0
    %301 = vmatprep.subr.bf16.mxu0 0
    %302 = vmatpush1.bf16.xpose.msra.mxu0 0
    %303 = vmatprep.subr.bf16.mxu0 0
    %304 = vmatpush1.bf16.xpose.msra.mxu0 0
    %305 = vmatprep.subr.bf16.mxu0 0
    %306 = vmatpush1.bf16.xpose.msra.mxu0 0
    %307 = vmatprep.subr.bf16.mxu0 0
    %308 = vmatpush1.bf16.xpose.msra.mxu0 0
    %309 = vmatprep.subr.bf16.mxu0 0
    %310 = vmatpush1.bf16.xpose.msra.mxu0 0
    %311 = vmatprep.mubr.bf16.mxu0 0
    %312 = vmatmul.mubr.bf16.gmra.mrb[0].mxu0 %v274
    %v313 = vpop.f32.mrb[0].mxu0
    %v314 = vadd.f32 0.0, %v313
    %v315 = vpop.f32.mrb[0].mxu0
    %v316 = vpop.f32.mrb[0].mxu0
    %v317 = vpop.f32.mrb[0].mxu0
    %318 = vdwg.mxu0
    %319 = vrot.lane.b32.xlu0 %v137, 120
    %v320 = vpop.permute.xlu0 %319
    %321 = vrot.lane.b32.xlu0 %v137, 88
    %v322 = vpop.permute.xlu0 %321
    %v324 = vsel %vm222, %v320, 0
    %v327 = vsel %vm222, %v322, 0
    %329 = vmatprep.subr.bf16.mxu0 0
    %330 = vmatpush1.bf16.xpose.msra.mxu0 %v327
    %331 = vmatprep.subr.bf16.mxu0 0
    %332 = vmatpush1.bf16.xpose.msra.mxu0 0
    %333 = vmatprep.subr.bf16.mxu0 0
    %334 = vmatpush1.bf16.xpose.msra.mxu0 0
    %335 = vmatprep.subr.bf16.mxu0 0
    %336 = vmatpush1.bf16.xpose.msra.mxu0 0
    %337 = vmatprep.subr.bf16.mxu0 0
    %338 = vmatpush1.bf16.xpose.msra.mxu0 0
    %339 = vmatprep.subr.bf16.mxu0 0
    %340 = vmatpush1.bf16.xpose.msra.mxu0 0
    %341 = vmatprep.subr.bf16.mxu0 0
    %342 = vmatpush1.bf16.xpose.msra.mxu0 0
    %343 = vmatprep.subr.bf16.mxu0 0
    %344 = vmatpush1.bf16.xpose.msra.mxu0 0
    %345 = vmatprep.subr.bf16.mxu0 0
    %346 = vmatpush1.bf16.xpose.msra.mxu0 0
    %347 = vmatprep.subr.bf16.mxu0 0
    %348 = vmatpush1.bf16.xpose.msra.mxu0 0
    %349 = vmatprep.subr.bf16.mxu0 0
    %350 = vmatpush1.bf16.xpose.msra.mxu0 0
    %351 = vmatprep.subr.bf16.mxu0 0
    %352 = vmatpush1.bf16.xpose.msra.mxu0 0
    %353 = vmatprep.subr.bf16.mxu0 0
    %354 = vmatpush1.bf16.xpose.msra.mxu0 0
    %355 = vmatprep.subr.bf16.mxu0 0
    %356 = vmatpush1.bf16.xpose.msra.mxu0 0
    %357 = vmatprep.subr.bf16.mxu0 0
    %358 = vmatpush1.bf16.xpose.msra.mxu0 0
    %359 = vmatprep.subr.bf16.mxu0 0
    %360 = vmatpush1.bf16.xpose.msra.mxu0 0
    %361 = vmatprep.mubr.bf16.mxu0 0
    %362 = vmatmul.mubr.bf16.gmra.mrb[0].mxu0 %v324
    %v363 = vpop.f32.mrb[0].mxu0
    %v364 = vadd.f32 0.0, %v363
    %v365 = vpop.f32.mrb[0].mxu0
    %v366 = vpop.f32.mrb[0].mxu0
    %v367 = vpop.f32.mrb[0].mxu0
    %368 = vdwg.mxu0
    %369 = vrot.lane.b32.xlu0 %v137, 116
    %v370 = vpop.permute.xlu0 %369
    %371 = vrot.lane.b32.xlu0 %v137, 84
    %v372 = vpop.permute.xlu0 %371
    %v374 = vsel %vm222, %v370, 0
    %v377 = vsel %vm222, %v372, 0
    %379 = vmatprep.subr.bf16.mxu0 0
    %380 = vmatpush1.bf16.xpose.msra.mxu0 %v377
    %381 = vmatprep.subr.bf16.mxu0 0
    %382 = vmatpush1.bf16.xpose.msra.mxu0 0
    %383 = vmatprep.subr.bf16.mxu0 0
    %384 = vmatpush1.bf16.xpose.msra.mxu0 0
    %385 = vmatprep.subr.bf16.mxu0 0
    %386 = vmatpush1.bf16.xpose.msra.mxu0 0
    %387 = vmatprep.subr.bf16.mxu0 0
    %388 = vmatpush1.bf16.xpose.msra.mxu0 0
    %389 = vmatprep.subr.bf16.mxu0 0
    %390 = vmatpush1.bf16.xpose.msra.mxu0 0
    %391 = vmatprep.subr.bf16.mxu0 0
    %392 = vmatpush1.bf16.xpose.msra.mxu0 0
    %393 = vmatprep.subr.bf16.mxu0 0
    %394 = vmatpush1.bf16.xpose.msra.mxu0 0
    %395 = vmatprep.subr.bf16.mxu0 0
    %396 = vmatpush1.bf16.xpose.msra.mxu0 0
    %397 = vmatprep.subr.bf16.mxu0 0
    %398 = vmatpush1.bf16.xpose.msra.mxu0 0
    %399 = vmatprep.subr.bf16.mxu0 0
    %400 = vmatpush1.bf16.xpose.msra.mxu0 0
    %401 = vmatprep.subr.bf16.mxu0 0
    %402 = vmatpush1.bf16.xpose.msra.mxu0 0
    %403 = vmatprep.subr.bf16.mxu0 0
    %404 = vmatpush1.bf16.xpose.msra.mxu0 0
    %405 = vmatprep.subr.bf16.mxu0 0
    %406 = vmatpush1.bf16.xpose.msra.mxu0 0
    %407 = vmatprep.subr.bf16.mxu0 0
    %408 = vmatpush1.bf16.xpose.msra.mxu0 0
    %409 = vmatprep.subr.bf16.mxu0 0
    %410 = vmatpush1.bf16.xpose.msra.mxu0 0
    %411 = vmatprep.mubr.bf16.mxu0 0
    %412 = vmatmul.mubr.bf16.gmra.mrb[0].mxu0 %v374
    %v413 = vpop.f32.mrb[0].mxu0
    %v414 = vadd.f32 0.0, %v413
    %v415 = vpop.f32.mrb[0].mxu0
    %v416 = vpop.f32.mrb[0].mxu0
    %v417 = vpop.f32.mrb[0].mxu0
    %418 = vdwg.mxu0
    %419 = vrot.lane.b32.xlu0 %v137, 112
    %v420 = vpop.permute.xlu0 %419
    %421 = vrot.lane.b32.xlu0 %v137, 80
    %v422 = vpop.permute.xlu0 %421
    %v424 = vsel %vm222, %v420, 0
    %v427 = vsel %vm222, %v422, 0
    %429 = vmatprep.subr.bf16.mxu0 0
    %430 = vmatpush1.bf16.xpose.msra.mxu0 %v427
    %431 = vmatprep.subr.bf16.mxu0 0
    %432 = vmatpush1.bf16.xpose.msra.mxu0 0
    %433 = vmatprep.subr.bf16.mxu0 0
    %434 = vmatpush1.bf16.xpose.msra.mxu0 0
    %435 = vmatprep.subr.bf16.mxu0 0
    %436 = vmatpush1.bf16.xpose.msra.mxu0 0
    %437 = vmatprep.subr.bf16.mxu0 0
    %438 = vmatpush1.bf16.xpose.msra.mxu0 0
    %439 = vmatprep.subr.bf16.mxu0 0
    %440 = vmatpush1.bf16.xpose.msra.mxu0 0
    %441 = vmatprep.subr.bf16.mxu0 0
    %442 = vmatpush1.bf16.xpose.msra.mxu0 0
    %443 = vmatprep.subr.bf16.mxu0 0
    %444 = vmatpush1.bf16.xpose.msra.mxu0 0
    %445 = vmatprep.subr.bf16.mxu0 0
    %446 = vmatpush1.bf16.xpose.msra.mxu0 0
    %447 = vmatprep.subr.bf16.mxu0 0
    %448 = vmatpush1.bf16.xpose.msra.mxu0 0
    %449 = vmatprep.subr.bf16.mxu0 0
    %450 = vmatpush1.bf16.xpose.msra.mxu0 0
    %451 = vmatprep.subr.bf16.mxu0 0
    %452 = vmatpush1.bf16.xpose.msra.mxu0 0
    %453 = vmatprep.subr.bf16.mxu0 0
    %454 = vmatpush1.bf16.xpose.msra.mxu0 0
    %455 = vmatprep.subr.bf16.mxu0 0
    %456 = vmatpush1.bf16.xpose.msra.mxu0 0
    %457 = vmatprep.subr.bf16.mxu0 0
    %458 = vmatpush1.bf16.xpose.msra.mxu0 0
    %459 = vmatprep.subr.bf16.mxu0 0
    %460 = vmatpush1.bf16.xpose.msra.mxu0 0
    %461 = vmatprep.mubr.bf16.mxu0 0
    %462 = vmatmul.mubr.bf16.gmra.mrb[0].mxu0 %v424
    %v463 = vpop.f32.mrb[0].mxu0
    %v464 = vadd.f32 0.0, %v463
    %v465 = vpop.f32.mrb[0].mxu0
    %v466 = vpop.f32.mrb[0].mxu0
    %v467 = vpop.f32.mrb[0].mxu0
    %468 = vdwg.mxu0
    %469 = vrot.lane.b32.xlu0 %v137, 108
    %v470 = vpop.permute.xlu0 %469
    %471 = vrot.lane.b32.xlu0 %v137, 76
    %v472 = vpop.permute.xlu0 %471
    %v474 = vsel %vm222, %v470, 0
    %v477 = vsel %vm222, %v472, 0
    %479 = vmatprep.subr.bf16.mxu0 0
    %480 = vmatpush1.bf16.xpose.msra.mxu0 %v477
    %481 = vmatprep.subr.bf16.mxu0 0
    %482 = vmatpush1.bf16.xpose.msra.mxu0 0
    %483 = vmatprep.subr.bf16.mxu0 0
    %484 = vmatpush1.bf16.xpose.msra.mxu0 0
    %485 = vmatprep.subr.bf16.mxu0 0
    %486 = vmatpush1.bf16.xpose.msra.mxu0 0
    %487 = vmatprep.subr.bf16.mxu0 0
    %488 = vmatpush1.bf16.xpose.msra.mxu0 0
    %489 = vmatprep.subr.bf16.mxu0 0
    %490 = vmatpush1.bf16.xpose.msra.mxu0 0
    %491 = vmatprep.subr.bf16.mxu0 0
    %492 = vmatpush1.bf16.xpose.msra.mxu0 0
    %493 = vmatprep.subr.bf16.mxu0 0
    %494 = vmatpush1.bf16.xpose.msra.mxu0 0
    %495 = vmatprep.subr.bf16.mxu0 0
    %496 = vmatpush1.bf16.xpose.msra.mxu0 0
    %497 = vmatprep.subr.bf16.mxu0 0
    %498 = vmatpush1.bf16.xpose.msra.mxu0 0
    %499 = vmatprep.subr.bf16.mxu0 0
    %500 = vmatpush1.bf16.xpose.msra.mxu0 0
    %501 = vmatprep.subr.bf16.mxu0 0
    %502 = vmatpush1.bf16.xpose.msra.mxu0 0
    %503 = vmatprep.subr.bf16.mxu0 0
    %504 = vmatpush1.bf16.xpose.msra.mxu0 0
    %505 = vmatprep.subr.bf16.mxu0 0
    %506 = vmatpush1.bf16.xpose.msra.mxu0 0
    %507 = vmatprep.subr.bf16.mxu0 0
    %508 = vmatpush1.bf16.xpose.msra.mxu0 0
    %509 = vmatprep.subr.bf16.mxu0 0
    %510 = vmatpush1.bf16.xpose.msra.mxu0 0
    %511 = vmatprep.mubr.bf16.mxu0 0
    %512 = vmatmul.mubr.bf16.gmra.mrb[0].mxu0 %v474
    %v513 = vpop.f32.mrb[0].mxu0
    %v514 = vadd.f32 0.0, %v513
    %v515 = vpop.f32.mrb[0].mxu0
    %v516 = vpop.f32.mrb[0].mxu0
    %v517 = vpop.f32.mrb[0].mxu0
    %518 = vdwg.mxu0
    %519 = vrot.lane.b32.xlu0 %v137, 104
    %v520 = vpop.permute.xlu0 %519
    %521 = vrot.lane.b32.xlu0 %v137, 72
    %v522 = vpop.permute.xlu0 %521
    %v524 = vsel %vm222, %v520, 0
    %v527 = vsel %vm222, %v522, 0
    %529 = vmatprep.subr.bf16.mxu0 0
    %530 = vmatpush1.bf16.xpose.msra.mxu0 %v527
    %531 = vmatprep.subr.bf16.mxu0 0
    %532 = vmatpush1.bf16.xpose.msra.mxu0 0
    %533 = vmatprep.subr.bf16.mxu0 0
    %534 = vmatpush1.bf16.xpose.msra.mxu0 0
    %535 = vmatprep.subr.bf16.mxu0 0
    %536 = vmatpush1.bf16.xpose.msra.mxu0 0
    %537 = vmatprep.subr.bf16.mxu0 0
    %538 = vmatpush1.bf16.xpose.msra.mxu0 0
    %539 = vmatprep.subr.bf16.mxu0 0
    %540 = vmatpush1.bf16.xpose.msra.mxu0 0
    %541 = vmatprep.subr.bf16.mxu0 0
    %542 = vmatpush1.bf16.xpose.msra.mxu0 0
    %543 = vmatprep.subr.bf16.mxu0 0
    %544 = vmatpush1.bf16.xpose.msra.mxu0 0
    %545 = vmatprep.subr.bf16.mxu0 0
    %546 = vmatpush1.bf16.xpose.msra.mxu0 0
    %547 = vmatprep.subr.bf16.mxu0 0
    %548 = vmatpush1.bf16.xpose.msra.mxu0 0
    %549 = vmatprep.subr.bf16.mxu0 0
    %550 = vmatpush1.bf16.xpose.msra.mxu0 0
    %551 = vmatprep.subr.bf16.mxu0 0
    %552 = vmatpush1.bf16.xpose.msra.mxu0 0
    %553 = vmatprep.subr.bf16.mxu0 0
    %554 = vmatpush1.bf16.xpose.msra.mxu0 0
    %555 = vmatprep.subr.bf16.mxu0 0
    %556 = vmatpush1.bf16.xpose.msra.mxu0 0
    %557 = vmatprep.subr.bf16.mxu0 0
    %558 = vmatpush1.bf16.xpose.msra.mxu0 0
    %559 = vmatprep.subr.bf16.mxu0 0
    %560 = vmatpush1.bf16.xpose.msra.mxu0 0
    %561 = vmatprep.mubr.bf16.mxu0 0
    %562 = vmatmul.mubr.bf16.gmra.mrb[0].mxu0 %v524
    %v563 = vpop.f32.mrb[0].mxu0
    %v564 = vadd.f32 0.0, %v563
    %v565 = vpop.f32.mrb[0].mxu0
    %v566 = vpop.f32.mrb[0].mxu0
    %v567 = vpop.f32.mrb[0].mxu0
    %568 = vdwg.mxu0
    %569 = vrot.lane.b32.xlu0 %v137, 100
    %v570 = vpop.permute.xlu0 %569
    %571 = vrot.lane.b32.xlu0 %v137, 68
    %v572 = vpop.permute.xlu0 %571
    %v574 = vsel %vm222, %v570, 0
    %v577 = vsel %vm222, %v572, 0
    %579 = vmatprep.subr.bf16.mxu0 0
    %580 = vmatpush1.bf16.xpose.msra.mxu0 %v577
    %581 = vmatprep.subr.bf16.mxu0 0
    %582 = vmatpush1.bf16.xpose.msra.mxu0 0
    %583 = vmatprep.subr.bf16.mxu0 0
    %584 = vmatpush1.bf16.xpose.msra.mxu0 0
    %585 = vmatprep.subr.bf16.mxu0 0
    %586 = vmatpush1.bf16.xpose.msra.mxu0 0
    %587 = vmatprep.subr.bf16.mxu0 0
    %588 = vmatpush1.bf16.xpose.msra.mxu0 0
    %589 = vmatprep.subr.bf16.mxu0 0
    %590 = vmatpush1.bf16.xpose.msra.mxu0 0
    %591 = vmatprep.subr.bf16.mxu0 0
    %592 = vmatpush1.bf16.xpose.msra.mxu0 0
    %593 = vmatprep.subr.bf16.mxu0 0
    %594 = vmatpush1.bf16.xpose.msra.mxu0 0
    %595 = vmatprep.subr.bf16.mxu0 0
    %596 = vmatpush1.bf16.xpose.msra.mxu0 0
    %597 = vmatprep.subr.bf16.mxu0 0
    %598 = vmatpush1.bf16.xpose.msra.mxu0 0
    %599 = vmatprep.subr.bf16.mxu0 0
    %600 = vmatpush1.bf16.xpose.msra.mxu0 0
    %601 = vmatprep.subr.bf16.mxu0 0
    %602 = vmatpush1.bf16.xpose.msra.mxu0 0
    %603 = vmatprep.subr.bf16.mxu0 0
    %604 = vmatpush1.bf16.xpose.msra.mxu0 0
    %605 = vmatprep.subr.bf16.mxu0 0
    %606 = vmatpush1.bf16.xpose.msra.mxu0 0
    %607 = vmatprep.subr.bf16.mxu0 0
    %608 = vmatpush1.bf16.xpose.msra.mxu0 0
    %609 = vmatprep.subr.bf16.mxu0 0
    %610 = vmatpush1.bf16.xpose.msra.mxu0 0
    %611 = vmatprep.mubr.bf16.mxu0 0
    %612 = vmatmul.mubr.bf16.gmra.mrb[0].mxu0 %v574
    %v613 = vpop.f32.mrb[0].mxu0
    %v614 = vadd.f32 0.0, %v613
    %v615 = vpop.f32.mrb[0].mxu0
    %v616 = vpop.f32.mrb[0].mxu0
    %v617 = vpop.f32.mrb[0].mxu0
    %618 = vdwg.mxu0
    %620 = vrot.lane.b32.xlu0 %v314, 8
    %v621 = vpop.permute.xlu0 %620
    %624 = vrot.lane.b32.xlu0 %v364, 16
    %v625 = vpop.permute.xlu0 %624
    %628 = vrot.lane.b32.xlu0 %v414, 24
    %v629 = vpop.permute.xlu0 %628
    %632 = vrot.lane.b32.xlu0 %v464, 32
    %v633 = vpop.permute.xlu0 %632
    %636 = vrot.lane.b32.xlu0 %v514, 40
    %v637 = vpop.permute.xlu0 %636
    %640 = vrot.lane.b32.xlu0 %v564, 48
    %v641 = vpop.permute.xlu0 %640
    %644 = vrot.lane.b32.xlu0 %v614, 56
    %v645 = vpop.permute.xlu0 %644
    %vm647 = vcmask 64512
    %v648 = vsel %vm647, %v264, %v621
    %vm649 = vcmask 130048
    %v650 = vsel %vm649, %v648, %v625
    %vm651 = vcmask 195584
    %v652 = vsel %vm651, %v650, %v629
    %v653 = vsel %vm92, %v652, %v633
    %vm654 = vcmask 326656
    %v655 = vsel %vm654, %v653, %v637
    %vm656 = vcmask 392192
    %v657 = vsel %vm656, %v655, %v641
    %vm658 = vcmask 457728
    %v659 = vsel %vm658, %v657, %v645
    %vm660 = vcmask 523264
    %v661 = vsel %vm660, %v659, -inf
    %v662 = vrot.slane %v661, 4
    %v663 = vmax.f32 %v661, %v662
    %v664 = vrot.slane %v663, 2
    %v665 = vmax.f32 %v663, %v664
    %v666 = vrot.slane %v665, 1
    %v667 = vmax.f32 %v665, %v666
    %v668 = vsub.f32 %v659, %v667
    %v669 = vmul.f32 %v668, 1.442695
    %v670 = vpow.pop %v669
    %v671 = vsel %vm660, %v670, 0.0
    %v672 = vrot.slane %v671, 4
    %v673 = vadd.f32 %v671, %v672
    %v674 = vrot.slane %v673, 2
    %v675 = vadd.f32 %v673, %v674
    %v676 = vrot.slane %v675, 1
    %v677 = vadd.f32 %v675, %v676
    %v678 = vrcp.pop %v677
    %v679 = vmul.f32 %v670, %v678
    %v680 = vpack.c.bf16 %v679, %v679
    %682 = vrot.lane.b32.xlu0 %v680, 120
    %v683 = vpop.permute.xlu0 %682
    %685 = vrot.lane.b32.xlu0 %v217, 96
    %v686 = vpop.permute.xlu0 %685
    %v688 = vsel %vm647, %v683, 0
    %vm690 = vcmask 1043456
    %v692 = vsel %vm690, %v686, 0
    %694 = vmatprep.subr.bf16.mxu0 0
    %695 = vmatpush1.bf16.msra.mxu0 %v692
    %696 = vmatprep.subr.bf16.mxu0 0
    %697 = vmatpush1.bf16.msra.mxu0 0
    %698 = vmatprep.subr.bf16.mxu0 0
    %699 = vmatpush1.bf16.msra.mxu0 0
    %700 = vmatprep.subr.bf16.mxu0 0
    %701 = vmatpush1.bf16.msra.mxu0 0
    %702 = vmatprep.subr.bf16.mxu0 0
    %703 = vmatpush1.bf16.msra.mxu0 0
    %704 = vmatprep.subr.bf16.mxu0 0
    %705 = vmatpush1.bf16.msra.mxu0 0
    %706 = vmatprep.subr.bf16.mxu0 0
    %707 = vmatpush1.bf16.msra.mxu0 0
    %708 = vmatprep.subr.bf16.mxu0 0
    %709 = vmatpush1.bf16.msra.mxu0 0
    %710 = vmatprep.subr.bf16.mxu0 0
    %711 = vmatpush1.bf16.msra.mxu0 0
    %712 = vmatprep.subr.bf16.mxu0 0
    %713 = vmatpush1.bf16.msra.mxu0 0
    %714 = vmatprep.subr.bf16.mxu0 0
    %715 = vmatpush1.bf16.msra.mxu0 0
    %716 = vmatprep.subr.bf16.mxu0 0
    %717 = vmatpush1.bf16.msra.mxu0 0
    %718 = vmatprep.subr.bf16.mxu0 0
    %719 = vmatpush1.bf16.msra.mxu0 0
    %720 = vmatprep.subr.bf16.mxu0 0
    %721 = vmatpush1.bf16.msra.mxu0 0
    %722 = vmatprep.subr.bf16.mxu0 0
    %723 = vmatpush1.bf16.msra.mxu0 0
    %724 = vmatprep.subr.bf16.mxu0 0
    %725 = vmatpush1.bf16.msra.mxu0 0
    %726 = vmatprep.mubr.bf16.mxu0 0
    %727 = vmatmul.mubr.bf16.gmra.mrb[0].mxu0 %v688
    %v728 = vpop.f32.mrb[0].mxu0
    %v729 = vadd.f32 0.0, %v728
    %v730 = vpop.f32.mrb[0].mxu0
    %v731 = vpop.f32.mrb[0].mxu0
    %v732 = vpop.f32.mrb[0].mxu0
    %733 = vdwg.mxu0
    %v735 = vsel %vm647, %v680, 0
    %v738 = vsel %vm690, %v217, 0
    %740 = vmatprep.subr.bf16.mxu0 0
    %741 = vmatpush1.bf16.msra.mxu0 %v738
    %742 = vmatprep.subr.bf16.mxu0 0
    %743 = vmatpush1.bf16.msra.mxu0 0
    %744 = vmatprep.subr.bf16.mxu0 0
    %745 = vmatpush1.bf16.msra.mxu0 0
    %746 = vmatprep.subr.bf16.mxu0 0
    %747 = vmatpush1.bf16.msra.mxu0 0
    %748 = vmatprep.subr.bf16.mxu0 0
    %749 = vmatpush1.bf16.msra.mxu0 0
    %750 = vmatprep.subr.bf16.mxu0 0
    %751 = vmatpush1.bf16.msra.mxu0 0
    %752 = vmatprep.subr.bf16.mxu0 0
    %753 = vmatpush1.bf16.msra.mxu0 0
    %754 = vmatprep.subr.bf16.mxu0 0
    %755 = vmatpush1.bf16.msra.mxu0 0
    %756 = vmatprep.subr.bf16.mxu0 0
    %757 = vmatpush1.bf16.msra.mxu0 0
    %758 = vmatprep.subr.bf16.mxu0 0
    %759 = vmatpush1.bf16.msra.mxu0 0
    %760 = vmatprep.subr.bf16.mxu0 0
    %761 = vmatpush1.bf16.msra.mxu0 0
    %762 = vmatprep.subr.bf16.mxu0 0
    %763 = vmatpush1.bf16.msra.mxu0 0
    %764 = vmatprep.subr.bf16.mxu0 0
    %765 = vmatpush1.bf16.msra.mxu0 0
    %766 = vmatprep.subr.bf16.mxu0 0
    %767 = vmatpush1.bf16.msra.mxu0 0
    %768 = vmatprep.subr.bf16.mxu0 0
    %769 = vmatpush1.bf16.msra.mxu0 0
    %770 = vmatprep.subr.bf16.mxu0 0
    %771 = vmatpush1.bf16.msra.mxu0 0
    %772 = vmatprep.mubr.bf16.mxu0 0
    %773 = vmatmul.mubr.bf16.gmra.mrb[0].mxu0 %v735
    %v774 = vpop.f32.mrb[0].mxu0
    %v775 = vadd.f32 %v729, %v774
    %v776 = vpop.f32.mrb[0].mxu0
    %v777 = vpop.f32.mrb[0].mxu0
    %v778 = vpop.f32.mrb[0].mxu0
    %779 = vdwg.mxu0
    %780 = vrot.lane.b32.xlu0 %v680, 112
    %v781 = vpop.permute.xlu0 %780
    %782 = vrot.lane.b32.xlu0 %v217, 64
    %v783 = vpop.permute.xlu0 %782
    %v785 = vsel %vm647, %v781, 0
    %v788 = vsel %vm690, %v783, 0
    %790 = vmatprep.subr.bf16.mxu0 0
    %791 = vmatpush1.bf16.msra.mxu0 %v788
    %792 = vmatprep.subr.bf16.mxu0 0
    %793 = vmatpush1.bf16.msra.mxu0 0
    %794 = vmatprep.subr.bf16.mxu0 0
    %795 = vmatpush1.bf16.msra.mxu0 0
    %796 = vmatprep.subr.bf16.mxu0 0
    %797 = vmatpush1.bf16.msra.mxu0 0
    %798 = vmatprep.subr.bf16.mxu0 0
    %799 = vmatpush1.bf16.msra.mxu0 0
    %800 = vmatprep.subr.bf16.mxu0 0
    %801 = vmatpush1.bf16.msra.mxu0 0
    %802 = vmatprep.subr.bf16.mxu0 0
    %803 = vmatpush1.bf16.msra.mxu0 0
    %804 = vmatprep.subr.bf16.mxu0 0
    %805 = vmatpush1.bf16.msra.mxu0 0
    %806 = vmatprep.subr.bf16.mxu0 0
    %807 = vmatpush1.bf16.msra.mxu0 0
    %808 = vmatprep.subr.bf16.mxu0 0
    %809 = vmatpush1.bf16.msra.mxu0 0
    %810 = vmatprep.subr.bf16.mxu0 0
    %811 = vmatpush1.bf16.msra.mxu0 0
    %812 = vmatprep.subr.bf16.mxu0 0
    %813 = vmatpush1.bf16.msra.mxu0 0
    %814 = vmatprep.subr.bf16.mxu0 0
    %815 = vmatpush1.bf16.msra.mxu0 0
    %816 = vmatprep.subr.bf16.mxu0 0
    %817 = vmatpush1.bf16.msra.mxu0 0
    %818 = vmatprep.subr.bf16.mxu0 0
    %819 = vmatpush1.bf16.msra.mxu0 0
    %820 = vmatprep.subr.bf16.mxu0 0
    %821 = vmatpush1.bf16.msra.mxu0 0
    %822 = vmatprep.mubr.bf16.mxu0 0
    %823 = vmatmul.mubr.bf16.gmra.mrb[0].mxu0 %v785
    %v824 = vpop.f32.mrb[0].mxu0
    %v825 = vadd.f32 0.0, %v824
    %v826 = vpop.f32.mrb[0].mxu0
    %v827 = vpop.f32.mrb[0].mxu0
    %v828 = vpop.f32.mrb[0].mxu0
    %829 = vdwg.mxu0
    %v830 = vadd.f32 %v775, %v825
    %831 = vrot.lane.b32.xlu0 %v680, 104
    %v832 = vpop.permute.xlu0 %831
    %833 = vrot.lane.b32.xlu0 %v217, 32
    %v834 = vpop.permute.xlu0 %833
    %v836 = vsel %vm647, %v832, 0
    %v839 = vsel %vm690, %v834, 0
    %841 = vmatprep.subr.bf16.mxu0 0
    %842 = vmatpush1.bf16.msra.mxu0 %v839
    %843 = vmatprep.subr.bf16.mxu0 0
    %844 = vmatpush1.bf16.msra.mxu0 0
    %845 = vmatprep.subr.bf16.mxu0 0
    %846 = vmatpush1.bf16.msra.mxu0 0
    %847 = vmatprep.subr.bf16.mxu0 0
    %848 = vmatpush1.bf16.msra.mxu0 0
    %849 = vmatprep.subr.bf16.mxu0 0
    %850 = vmatpush1.bf16.msra.mxu0 0
    %851 = vmatprep.subr.bf16.mxu0 0
    %852 = vmatpush1.bf16.msra.mxu0 0
    %853 = vmatprep.subr.bf16.mxu0 0
    %854 = vmatpush1.bf16.msra.mxu0 0
    %855 = vmatprep.subr.bf16.mxu0 0
    %856 = vmatpush1.bf16.msra.mxu0 0
    %857 = vmatprep.subr.bf16.mxu0 0
    %858 = vmatpush1.bf16.msra.mxu0 0
    %859 = vmatprep.subr.bf16.mxu0 0
    %860 = vmatpush1.bf16.msra.mxu0 0
    %861 = vmatprep.subr.bf16.mxu0 0
    %862 = vmatpush1.bf16.msra.mxu0 0
    %863 = vmatprep.subr.bf16.mxu0 0
    %864 = vmatpush1.bf16.msra.mxu0 0
    %865 = vmatprep.subr.bf16.mxu0 0
    %866 = vmatpush1.bf16.msra.mxu0 0
    %867 = vmatprep.subr.bf16.mxu0 0
    %868 = vmatpush1.bf16.msra.mxu0 0
    %869 = vmatprep.subr.bf16.mxu0 0
    %870 = vmatpush1.bf16.msra.mxu0 0
    %871 = vmatprep.subr.bf16.mxu0 0
    %872 = vmatpush1.bf16.msra.mxu0 0
    %873 = vmatprep.mubr.bf16.mxu0 0
    %874 = vmatmul.mubr.bf16.gmra.mrb[0].mxu0 %v836
    %v875 = vpop.f32.mrb[0].mxu0
    %v876 = vadd.f32 0.0, %v875
    %v877 = vpop.f32.mrb[0].mxu0
    %v878 = vpop.f32.mrb[0].mxu0
    %v879 = vpop.f32.mrb[0].mxu0
    %880 = vdwg.mxu0
    %v881 = vadd.f32 %v830, %v876
    %882 = vrot.lane.b32.xlu0 %v680, 96
    %v883 = vpop.permute.xlu0 %882
    %v885 = vsel %vm647, %v883, 0
    %v888 = vsel %vm690, %v218, 0
    %890 = vmatprep.subr.bf16.mxu0 0
    %891 = vmatpush1.bf16.msra.mxu0 %v888
    %892 = vmatprep.subr.bf16.mxu0 0
    %893 = vmatpush1.bf16.msra.mxu0 0
    %894 = vmatprep.subr.bf16.mxu0 0
    %895 = vmatpush1.bf16.msra.mxu0 0
    %896 = vmatprep.subr.bf16.mxu0 0
    %897 = vmatpush1.bf16.msra.mxu0 0
    %898 = vmatprep.subr.bf16.mxu0 0
    %899 = vmatpush1.bf16.msra.mxu0 0
    %900 = vmatprep.subr.bf16.mxu0 0
    %901 = vmatpush1.bf16.msra.mxu0 0
    %902 = vmatprep.subr.bf16.mxu0 0
    %903 = vmatpush1.bf16.msra.mxu0 0
    %904 = vmatprep.subr.bf16.mxu0 0
    %905 = vmatpush1.bf16.msra.mxu0 0
    %906 = vmatprep.subr.bf16.mxu0 0
    %907 = vmatpush1.bf16.msra.mxu0 0
    %908 = vmatprep.subr.bf16.mxu0 0
    %909 = vmatpush1.bf16.msra.mxu0 0
    %910 = vmatprep.subr.bf16.mxu0 0
    %911 = vmatpush1.bf16.msra.mxu0 0
    %912 = vmatprep.subr.bf16.mxu0 0
    %913 = vmatpush1.bf16.msra.mxu0 0
    %914 = vmatprep.subr.bf16.mxu0 0
    %915 = vmatpush1.bf16.msra.mxu0 0
    %916 = vmatprep.subr.bf16.mxu0 0
    %917 = vmatpush1.bf16.msra.mxu0 0
    %918 = vmatprep.subr.bf16.mxu0 0
    %919 = vmatpush1.bf16.msra.mxu0 0
    %920 = vmatprep.subr.bf16.mxu0 0
    %921 = vmatpush1.bf16.msra.mxu0 0
    %922 = vmatprep.mubr.bf16.mxu0 0
    %923 = vmatmul.mubr.bf16.gmra.mrb[0].mxu0 %v885
    %v924 = vpop.f32.mrb[0].mxu0
    %v925 = vadd.f32 0.0, %v924
    %v926 = vpop.f32.mrb[0].mxu0
    %v927 = vpop.f32.mrb[0].mxu0
    %v928 = vpop.f32.mrb[0].mxu0
    %929 = vdwg.mxu0
    %v930 = vadd.f32 %v881, %v925
    %931 = vrot.lane.b32.xlu0 %v680, 88
    %v932 = vpop.permute.xlu0 %931
    %934 = vrot.lane.b32.xlu0 %v218, 96
    %v935 = vpop.permute.xlu0 %934
    %v937 = vsel %vm647, %v932, 0
    %v940 = vsel %vm690, %v935, 0
    %942 = vmatprep.subr.bf16.mxu0 0
    %943 = vmatpush1.bf16.msra.mxu0 %v940
    %944 = vmatprep.subr.bf16.mxu0 0
    %945 = vmatpush1.bf16.msra.mxu0 0
    %946 = vmatprep.subr.bf16.mxu0 0
    %947 = vmatpush1.bf16.msra.mxu0 0
    %948 = vmatprep.subr.bf16.mxu0 0
    %949 = vmatpush1.bf16.msra.mxu0 0
    %950 = vmatprep.subr.bf16.mxu0 0
    %951 = vmatpush1.bf16.msra.mxu0 0
    %952 = vmatprep.subr.bf16.mxu0 0
    %953 = vmatpush1.bf16.msra.mxu0 0
    %954 = vmatprep.subr.bf16.mxu0 0
    %955 = vmatpush1.bf16.msra.mxu0 0
    %956 = vmatprep.subr.bf16.mxu0 0
    %957 = vmatpush1.bf16.msra.mxu0 0
    %958 = vmatprep.subr.bf16.mxu0 0
    %959 = vmatpush1.bf16.msra.mxu0 0
    %960 = vmatprep.subr.bf16.mxu0 0
    %961 = vmatpush1.bf16.msra.mxu0 0
    %962 = vmatprep.subr.bf16.mxu0 0
    %963 = vmatpush1.bf16.msra.mxu0 0
    %964 = vmatprep.subr.bf16.mxu0 0
    %965 = vmatpush1.bf16.msra.mxu0 0
    %966 = vmatprep.subr.bf16.mxu0 0
    %967 = vmatpush1.bf16.msra.mxu0 0
    %968 = vmatprep.subr.bf16.mxu0 0
    %969 = vmatpush1.bf16.msra.mxu0 0
    %970 = vmatprep.subr.bf16.mxu0 0
    %971 = vmatpush1.bf16.msra.mxu0 0
    %972 = vmatprep.subr.bf16.mxu0 0
    %973 = vmatpush1.bf16.msra.mxu0 0
    %974 = vmatprep.mubr.bf16.mxu0 0
    %975 = vmatmul.mubr.bf16.gmra.mrb[0].mxu0 %v937
    %v976 = vpop.f32.mrb[0].mxu0
    %v977 = vadd.f32 0.0, %v976
    %v978 = vpop.f32.mrb[0].mxu0
    %v979 = vpop.f32.mrb[0].mxu0
    %v980 = vpop.f32.mrb[0].mxu0
    %981 = vdwg.mxu0
    %v982 = vadd.f32 %v930, %v977
    %983 = vrot.lane.b32.xlu0 %v680, 80
    %v984 = vpop.permute.xlu0 %983
    %985 = vrot.lane.b32.xlu0 %v218, 64
    %v986 = vpop.permute.xlu0 %985
    %v988 = vsel %vm647, %v984, 0
    %v991 = vsel %vm690, %v986, 0
    %993 = vmatprep.subr.bf16.mxu0 0
    %994 = vmatpush1.bf16.msra.mxu0 %v991
    %995 = vmatprep.subr.bf16.mxu0 0
    %996 = vmatpush1.bf16.msra.mxu0 0
    %997 = vmatprep.subr.bf16.mxu0 0
    %998 = vmatpush1.bf16.msra.mxu0 0
    %999 = vmatprep.subr.bf16.mxu0 0
    %1000 = vmatpush1.bf16.msra.mxu0 0
    %1001 = vmatprep.subr.bf16.mxu0 0
    %1002 = vmatpush1.bf16.msra.mxu0 0
    %1003 = vmatprep.subr.bf16.mxu0 0
    %1004 = vmatpush1.bf16.msra.mxu0 0
    %1005 = vmatprep.subr.bf16.mxu0 0
    %1006 = vmatpush1.bf16.msra.mxu0 0
    %1007 = vmatprep.subr.bf16.mxu0 0
    %1008 = vmatpush1.bf16.msra.mxu0 0
    %1009 = vmatprep.subr.bf16.mxu0 0
    %1010 = vmatpush1.bf16.msra.mxu0 0
    %1011 = vmatprep.subr.bf16.mxu0 0
    %1012 = vmatpush1.bf16.msra.mxu0 0
    %1013 = vmatprep.subr.bf16.mxu0 0
    %1014 = vmatpush1.bf16.msra.mxu0 0
    %1015 = vmatprep.subr.bf16.mxu0 0
    %1016 = vmatpush1.bf16.msra.mxu0 0
    %1017 = vmatprep.subr.bf16.mxu0 0
    %1018 = vmatpush1.bf16.msra.mxu0 0
    %1019 = vmatprep.subr.bf16.mxu0 0
    %1020 = vmatpush1.bf16.msra.mxu0 0
    %1021 = vmatprep.subr.bf16.mxu0 0
    %1022 = vmatpush1.bf16.msra.mxu0 0
    %1023 = vmatprep.subr.bf16.mxu0 0
    %1024 = vmatpush1.bf16.msra.mxu0 0
    %1025 = vmatprep.mubr.bf16.mxu0 0
    %1026 = vmatmul.mubr.bf16.gmra.mrb[0].mxu0 %v988
    %v1027 = vpop.f32.mrb[0].mxu0
    %v1028 = vadd.f32 0.0, %v1027
    %v1029 = vpop.f32.mrb[0].mxu0
    %v1030 = vpop.f32.mrb[0].mxu0
    %v1031 = vpop.f32.mrb[0].mxu0
    %1032 = vdwg.mxu0
    %v1033 = vadd.f32 %v982, %v1028
    %1034 = vrot.lane.b32.xlu0 %v680, 72
    %v1035 = vpop.permute.xlu0 %1034
    %1036 = vrot.lane.b32.xlu0 %v218, 32
    %v1037 = vpop.permute.xlu0 %1036
    %v1039 = vsel %vm647, %v1035, 0
    %v1042 = vsel %vm690, %v1037, 0
    %1044 = vmatprep.subr.bf16.mxu0 0
    %1045 = vmatpush1.bf16.msra.mxu0 %v1042
    %1046 = vmatprep.subr.bf16.mxu0 0
    %1047 = vmatpush1.bf16.msra.mxu0 0
    %1048 = vmatprep.subr.bf16.mxu0 0
    %1049 = vmatpush1.bf16.msra.mxu0 0
    %1050 = vmatprep.subr.bf16.mxu0 0
    %1051 = vmatpush1.bf16.msra.mxu0 0
    %1052 = vmatprep.subr.bf16.mxu0 0
    %1053 = vmatpush1.bf16.msra.mxu0 0
    %1054 = vmatprep.subr.bf16.mxu0 0
    %1055 = vmatpush1.bf16.msra.mxu0 0
    %1056 = vmatprep.subr.bf16.mxu0 0
    %1057 = vmatpush1.bf16.msra.mxu0 0
    %1058 = vmatprep.subr.bf16.mxu0 0
    %1059 = vmatpush1.bf16.msra.mxu0 0
    %1060 = vmatprep.subr.bf16.mxu0 0
    %1061 = vmatpush1.bf16.msra.mxu0 0
    %1062 = vmatprep.subr.bf16.mxu0 0
    %1063 = vmatpush1.bf16.msra.mxu0 0
    %1064 = vmatprep.subr.bf16.mxu0 0
    %1065 = vmatpush1.bf16.msra.mxu0 0
    %1066 = vmatprep.subr.bf16.mxu0 0
    %1067 = vmatpush1.bf16.msra.mxu0 0
    %1068 = vmatprep.subr.bf16.mxu0 0
    %1069 = vmatpush1.bf16.msra.mxu0 0
    %1070 = vmatprep.subr.bf16.mxu0 0
    %1071 = vmatpush1.bf16.msra.mxu0 0
    %1072 = vmatprep.subr.bf16.mxu0 0
    %1073 = vmatpush1.bf16.msra.mxu0 0
    %1074 = vmatprep.subr.bf16.mxu0 0
    %1075 = vmatpush1.bf16.msra.mxu0 0
    %1076 = vmatprep.mubr.bf16.mxu0 0
    %1077 = vmatmul.mubr.bf16.gmra.mrb[0].mxu0 %v1039
    %v1078 = vpop.f32.mrb[0].mxu0
    %v1079 = vadd.f32 0.0, %v1078
    %v1080 = vpop.f32.mrb[0].mxu0
    %v1081 = vpop.f32.mrb[0].mxu0
    %v1082 = vpop.f32.mrb[0].mxu0
    %1083 = vdwg.mxu0
    %v1084 = vadd.f32 %v1033, %v1079
    %v1085 = vld [vmem:[%s5] sm:$0x1]
    %v1087 = vlaneseq
    %v1088 = vshrl.u32 %v1087, 7
    %v1089 = vsub.s32 0, %v1088
    %v1090 = vrot.slane %v1085, %v1089
    %v1092 = vadd.f32 %v1084, %v1090
    %1093 = vst.msk [vmem:[#allocation8] sm:$0xff] %vm92, %v1092
    %v1094 = vrot.slane %v137, 4
    %1095 = vrot.lane.b32.xlu0 %v1094, 96
    %v1096 = vpop.permute.xlu0 %1095
    %v1098 = vsel %vm222, %v1094, 0
    %v1101 = vsel %vm222, %v1096, 0
    %1103 = vmatprep.subr.bf16.mxu0 0
    %1104 = vmatpush1.bf16.xpose.msra.mxu0 %v1101
    %1105 = vmatprep.subr.bf16.mxu0 0
    %1106 = vmatpush1.bf16.xpose.msra.mxu0 0
    %1107 = vmatprep.subr.bf16.mxu0 0
    %1108 = vmatpush1.bf16.xpose.msra.mxu0 0
    %1109 = vmatprep.subr.bf16.mxu0 0
    %1110 = vmatpush1.bf16.xpose.msra.mxu0 0
    %1111 = vmatprep.subr.bf16.mxu0 0
    %1112 = vmatpush1.bf16.xpose.msra.mxu0 0
    %1113 = vmatprep.subr.bf16.mxu0 0
    %1114 = vmatpush1.bf16.xpose.msra.mxu0 0
    %1115 = vmatprep.subr.bf16.mxu0 0
    %1116 = vmatpush1.bf16.xpose.msra.mxu0 0
    %1117 = vmatprep.subr.bf16.mxu0 0
    %1118 = vmatpush1.bf16.xpose.msra.mxu0 0
    %1119 = vmatprep.subr.bf16.mxu0 0
    %1120 = vmatpush1.bf16.xpose.msra.mxu0 0
    %1121 = vmatprep.subr.bf16.mxu0 0
    %1122 = vmatpush1.bf16.xpose.msra.mxu0 0
    %1123 = vmatprep.subr.bf16.mxu0 0
    %1124 = vmatpush1.bf16.xpose.msra.mxu0 0
    %1125 = vmatprep.subr.bf16.mxu0 0
    %1126 = vmatpush1.bf16.xpose.msra.mxu0 0
    %1127 = vmatprep.subr.bf16.mxu0 0
    %1128 = vmatpush1.bf16.xpose.msra.mxu0 0
    %1129 = vmatprep.subr.bf16.mxu0 0
    %1130 = vmatpush1.bf16.xpose.msra.mxu0 0
    %1131 = vmatprep.subr.bf16.mxu0 0
    %1132 = vmatpush1.bf16.xpose.msra.mxu0 0
    %1133 = vmatprep.subr.bf16.mxu0 0
    %1134 = vmatpush1.bf16.xpose.msra.mxu0 0
    %1135 = vmatprep.mubr.bf16.mxu0 0
    %1136 = vmatmul.mubr.bf16.gmra.mrb[0].mxu0 %v1098
    %v1137 = vpop.f32.mrb[0].mxu0
    %v1138 = vadd.f32 0.0, %v1137
    %v1139 = vpop.f32.mrb[0].mxu0
    %v1140 = vpop.f32.mrb[0].mxu0
    %v1141 = vpop.f32.mrb[0].mxu0
    %1142 = vdwg.mxu0
    %1143 = vrot.lane.b32.xlu0 %v1094, 124
    %v1144 = vpop.permute.xlu0 %1143
    %1145 = vrot.lane.b32.xlu0 %v1094, 92
    %v1146 = vpop.permute.xlu0 %1145
    %v1148 = vsel %vm222, %v1144, 0
    %v1151 = vsel %vm222, %v1146, 0
    %1153 = vmatprep.subr.bf16.mxu0 0
    %1154 = vmatpush1.bf16.xpose.msra.mxu0 %v1151
    %1155 = vmatprep.subr.bf16.mxu0 0
    %1156 = vmatpush1.bf16.xpose.msra.mxu0 0
    %1157 = vmatprep.subr.bf16.mxu0 0
    %1158 = vmatpush1.bf16.xpose.msra.mxu0 0
    %1159 = vmatprep.subr.bf16.mxu0 0
    %1160 = vmatpush1.bf16.xpose.msra.mxu0 0
    %1161 = vmatprep.subr.bf16.mxu0 0
    %1162 = vmatpush1.bf16.xpose.msra.mxu0 0
    %1163 = vmatprep.subr.bf16.mxu0 0
    %1164 = vmatpush1.bf16.xpose.msra.mxu0 0
    %1165 = vmatprep.subr.bf16.mxu0 0
    %1166 = vmatpush1.bf16.xpose.msra.mxu0 0
    %1167 = vmatprep.subr.bf16.mxu0 0
    %1168 = vmatpush1.bf16.xpose.msra.mxu0 0
    %1169 = vmatprep.subr.bf16.mxu0 0
    %1170 = vmatpush1.bf16.xpose.msra.mxu0 0
    %1171 = vmatprep.subr.bf16.mxu0 0
    %1172 = vmatpush1.bf16.xpose.msra.mxu0 0
    %1173 = vmatprep.subr.bf16.mxu0 0
    %1174 = vmatpush1.bf16.xpose.msra.mxu0 0
    %1175 = vmatprep.subr.bf16.mxu0 0
    %1176 = vmatpush1.bf16.xpose.msra.mxu0 0
    %1177 = vmatprep.subr.bf16.mxu0 0
    %1178 = vmatpush1.bf16.xpose.msra.mxu0 0
    %1179 = vmatprep.subr.bf16.mxu0 0
    %1180 = vmatpush1.bf16.xpose.msra.mxu0 0
    %1181 = vmatprep.subr.bf16.mxu0 0
    %1182 = vmatpush1.bf16.xpose.msra.mxu0 0
    %1183 = vmatprep.subr.bf16.mxu0 0
    %1184 = vmatpush1.bf16.xpose.msra.mxu0 0
    %1185 = vmatprep.mubr.bf16.mxu0 0
    %1186 = vmatmul.mubr.bf16.gmra.mrb[0].mxu0 %v1148
    %v1187 = vpop.f32.mrb[0].mxu0
    %v1188 = vadd.f32 0.0, %v1187
    %v1189 = vpop.f32.mrb[0].mxu0
    %v1190 = vpop.f32.mrb[0].mxu0
    %v1191 = vpop.f32.mrb[0].mxu0
    %1192 = vdwg.mxu0
    %1193 = vrot.lane.b32.xlu0 %v1094, 120
    %v1194 = vpop.permute.xlu0 %1193
    %1195 = vrot.lane.b32.xlu0 %v1094, 88
    %v1196 = vpop.permute.xlu0 %1195
    %v1198 = vsel %vm222, %v1194, 0
    %v1201 = vsel %vm222, %v1196, 0
    %1203 = vmatprep.subr.bf16.mxu0 0
    %1204 = vmatpush1.bf16.xpose.msra.mxu0 %v1201
    %1205 = vmatprep.subr.bf16.mxu0 0
    %1206 = vmatpush1.bf16.xpose.msra.mxu0 0
    %1207 = vmatprep.subr.bf16.mxu0 0
    %1208 = vmatpush1.bf16.xpose.msra.mxu0 0
    %1209 = vmatprep.subr.bf16.mxu0 0
    %1210 = vmatpush1.bf16.xpose.msra.mxu0 0
    %1211 = vmatprep.subr.bf16.mxu0 0
    %1212 = vmatpush1.bf16.xpose.msra.mxu0 0
    %1213 = vmatprep.subr.bf16.mxu0 0
    %1214 = vmatpush1.bf16.xpose.msra.mxu0 0
    %1215 = vmatprep.subr.bf16.mxu0 0
    %1216 = vmatpush1.bf16.xpose.msra.mxu0 0
    %1217 = vmatprep.subr.bf16.mxu0 0
    %1218 = vmatpush1.bf16.xpose.msra.mxu0 0
    %1219 = vmatprep.subr.bf16.mxu0 0
    %1220 = vmatpush1.bf16.xpose.msra.mxu0 0
    %1221 = vmatprep.subr.bf16.mxu0 0
    %1222 = vmatpush1.bf16.xpose.msra.mxu0 0
    %1223 = vmatprep.subr.bf16.mxu0 0
    %1224 = vmatpush1.bf16.xpose.msra.mxu0 0
    %1225 = vmatprep.subr.bf16.mxu0 0
    %1226 = vmatpush1.bf16.xpose.msra.mxu0 0
    %1227 = vmatprep.subr.bf16.mxu0 0
    %1228 = vmatpush1.bf16.xpose.msra.mxu0 0
    %1229 = vmatprep.subr.bf16.mxu0 0
    %1230 = vmatpush1.bf16.xpose.msra.mxu0 0
    %1231 = vmatprep.subr.bf16.mxu0 0
    %1232 = vmatpush1.bf16.xpose.msra.mxu0 0
    %1233 = vmatprep.subr.bf16.mxu0 0
    %1234 = vmatpush1.bf16.xpose.msra.mxu0 0
    %1235 = vmatprep.mubr.bf16.mxu0 0
    %1236 = vmatmul.mubr.bf16.gmra.mrb[0].mxu0 %v1198
    %v1237 = vpop.f32.mrb[0].mxu0
    %v1238 = vadd.f32 0.0, %v1237
    %v1239 = vpop.f32.mrb[0].mxu0
    %v1240 = vpop.f32.mrb[0].mxu0
    %v1241 = vpop.f32.mrb[0].mxu0
    %1242 = vdwg.mxu0
    %1243 = vrot.lane.b32.xlu0 %v1094, 116
    %v1244 = vpop.permute.xlu0 %1243
    %1245 = vrot.lane.b32.xlu0 %v1094, 84
    %v1246 = vpop.permute.xlu0 %1245
    %v1248 = vsel %vm222, %v1244, 0
    %v1251 = vsel %vm222, %v1246, 0
    %1253 = vmatprep.subr.bf16.mxu0 0
    %1254 = vmatpush1.bf16.xpose.msra.mxu0 %v1251
    %1255 = vmatprep.subr.bf16.mxu0 0
    %1256 = vmatpush1.bf16.xpose.msra.mxu0 0
    %1257 = vmatprep.subr.bf16.mxu0 0
    %1258 = vmatpush1.bf16.xpose.msra.mxu0 0
    %1259 = vmatprep.subr.bf16.mxu0 0
    %1260 = vmatpush1.bf16.xpose.msra.mxu0 0
    %1261 = vmatprep.subr.bf16.mxu0 0
    %1262 = vmatpush1.bf16.xpose.msra.mxu0 0
    %1263 = vmatprep.subr.bf16.mxu0 0
    %1264 = vmatpush1.bf16.xpose.msra.mxu0 0
    %1265 = vmatprep.subr.bf16.mxu0 0
    %1266 = vmatpush1.bf16.xpose.msra.mxu0 0
    %1267 = vmatprep.subr.bf16.mxu0 0
    %1268 = vmatpush1.bf16.xpose.msra.mxu0 0
    %1269 = vmatprep.subr.bf16.mxu0 0
    %1270 = vmatpush1.bf16.xpose.msra.mxu0 0
    %1271 = vmatprep.subr.bf16.mxu0 0
    %1272 = vmatpush1.bf16.xpose.msra.mxu0 0
    %1273 = vmatprep.subr.bf16.mxu0 0
    %1274 = vmatpush1.bf16.xpose.msra.mxu0 0
    %1275 = vmatprep.subr.bf16.mxu0 0
    %1276 = vmatpush1.bf16.xpose.msra.mxu0 0
    %1277 = vmatprep.subr.bf16.mxu0 0
    %1278 = vmatpush1.bf16.xpose.msra.mxu0 0
    %1279 = vmatprep.subr.bf16.mxu0 0
    %1280 = vmatpush1.bf16.xpose.msra.mxu0 0
    %1281 = vmatprep.subr.bf16.mxu0 0
    %1282 = vmatpush1.bf16.xpose.msra.mxu0 0
    %1283 = vmatprep.subr.bf16.mxu0 0
    %1284 = vmatpush1.bf16.xpose.msra.mxu0 0
    %1285 = vmatprep.mubr.bf16.mxu0 0
    %1286 = vmatmul.mubr.bf16.gmra.mrb[0].mxu0 %v1248
    %v1287 = vpop.f32.mrb[0].mxu0
    %v1288 = vadd.f32 0.0, %v1287
    %v1289 = vpop.f32.mrb[0].mxu0
    %v1290 = vpop.f32.mrb[0].mxu0
    %v1291 = vpop.f32.mrb[0].mxu0
    %1292 = vdwg.mxu0
    %1293 = vrot.lane.b32.xlu0 %v1094, 112
    %v1294 = vpop.permute.xlu0 %1293
    %1295 = vrot.lane.b32.xlu0 %v1094, 80
    %v1296 = vpop.permute.xlu0 %1295
    %v1298 = vsel %vm222, %v1294, 0
    %v1301 = vsel %vm222, %v1296, 0
    %1303 = vmatprep.subr.bf16.mxu0 0
    %1304 = vmatpush1.bf16.xpose.msra.mxu0 %v1301
    %1305 = vmatprep.subr.bf16.mxu0 0
    %1306 = vmatpush1.bf16.xpose.msra.mxu0 0
    %1307 = vmatprep.subr.bf16.mxu0 0
    %1308 = vmatpush1.bf16.xpose.msra.mxu0 0
    %1309 = vmatprep.subr.bf16.mxu0 0
    %1310 = vmatpush1.bf16.xpose.msra.mxu0 0
    %1311 = vmatprep.subr.bf16.mxu0 0
    %1312 = vmatpush1.bf16.xpose.msra.mxu0 0
    %1313 = vmatprep.subr.bf16.mxu0 0
    %1314 = vmatpush1.bf16.xpose.msra.mxu0 0
    %1315 = vmatprep.subr.bf16.mxu0 0
    %1316 = vmatpush1.bf16.xpose.msra.mxu0 0
    %1317 = vmatprep.subr.bf16.mxu0 0
    %1318 = vmatpush1.bf16.xpose.msra.mxu0 0
    %1319 = vmatprep.subr.bf16.mxu0 0
    %1320 = vmatpush1.bf16.xpose.msra.mxu0 0
    %1321 = vmatprep.subr.bf16.mxu0 0
    %1322 = vmatpush1.bf16.xpose.msra.mxu0 0
    %1323 = vmatprep.subr.bf16.mxu0 0
    %1324 = vmatpush1.bf16.xpose.msra.mxu0 0
    %1325 = vmatprep.subr.bf16.mxu0 0
    %1326 = vmatpush1.bf16.xpose.msra.mxu0 0
    %1327 = vmatprep.subr.bf16.mxu0 0
    %1328 = vmatpush1.bf16.xpose.msra.mxu0 0
    %1329 = vmatprep.subr.bf16.mxu0 0
    %1330 = vmatpush1.bf16.xpose.msra.mxu0 0
    %1331 = vmatprep.subr.bf16.mxu0 0
    %1332 = vmatpush1.bf16.xpose.msra.mxu0 0
    %1333 = vmatprep.subr.bf16.mxu0 0
    %1334 = vmatpush1.bf16.xpose.msra.mxu0 0
    %1335 = vmatprep.mubr.bf16.mxu0 0
    %1336 = vmatmul.mubr.bf16.gmra.mrb[0].mxu0 %v1298
    %v1337 = vpop.f32.mrb[0].mxu0
    %v1338 = vadd.f32 0.0, %v1337
    %v1339 = vpop.f32.mrb[0].mxu0
    %v1340 = vpop.f32.mrb[0].mxu0
    %v1341 = vpop.f32.mrb[0].mxu0
    %1342 = vdwg.mxu0
    %1343 = vrot.lane.b32.xlu0 %v1094, 108
    %v1344 = vpop.permute.xlu0 %1343
    %1345 = vrot.lane.b32.xlu0 %v1094, 76
    %v1346 = vpop.permute.xlu0 %1345
    %v1348 = vsel %vm222, %v1344, 0
    %v1351 = vsel %vm222, %v1346, 0
    %1353 = vmatprep.subr.bf16.mxu0 0
    %1354 = vmatpush1.bf16.xpose.msra.mxu0 %v1351
    %1355 = vmatprep.subr.bf16.mxu0 0
    %1356 = vmatpush1.bf16.xpose.msra.mxu0 0
    %1357 = vmatprep.subr.bf16.mxu0 0
    %1358 = vmatpush1.bf16.xpose.msra.mxu0 0
    %1359 = vmatprep.subr.bf16.mxu0 0
    %1360 = vmatpush1.bf16.xpose.msra.mxu0 0
    %1361 = vmatprep.subr.bf16.mxu0 0
    %1362 = vmatpush1.bf16.xpose.msra.mxu0 0
    %1363 = vmatprep.subr.bf16.mxu0 0
    %1364 = vmatpush1.bf16.xpose.msra.mxu0 0
    %1365 = vmatprep.subr.bf16.mxu0 0
    %1366 = vmatpush1.bf16.xpose.msra.mxu0 0
    %1367 = vmatprep.subr.bf16.mxu0 0
    %1368 = vmatpush1.bf16.xpose.msra.mxu0 0
    %1369 = vmatprep.subr.bf16.mxu0 0
    %1370 = vmatpush1.bf16.xpose.msra.mxu0 0
    %1371 = vmatprep.subr.bf16.mxu0 0
    %1372 = vmatpush1.bf16.xpose.msra.mxu0 0
    %1373 = vmatprep.subr.bf16.mxu0 0
    %1374 = vmatpush1.bf16.xpose.msra.mxu0 0
    %1375 = vmatprep.subr.bf16.mxu0 0
    %1376 = vmatpush1.bf16.xpose.msra.mxu0 0
    %1377 = vmatprep.subr.bf16.mxu0 0
    %1378 = vmatpush1.bf16.xpose.msra.mxu0 0
    %1379 = vmatprep.subr.bf16.mxu0 0
    %1380 = vmatpush1.bf16.xpose.msra.mxu0 0
    %1381 = vmatprep.subr.bf16.mxu0 0
    %1382 = vmatpush1.bf16.xpose.msra.mxu0 0
    %1383 = vmatprep.subr.bf16.mxu0 0
    %1384 = vmatpush1.bf16.xpose.msra.mxu0 0
    %1385 = vmatprep.mubr.bf16.mxu0 0
    %1386 = vmatmul.mubr.bf16.gmra.mrb[0].mxu0 %v1348
    %v1387 = vpop.f32.mrb[0].mxu0
    %v1388 = vadd.f32 0.0, %v1387
    %v1389 = vpop.f32.mrb[0].mxu0
    %v1390 = vpop.f32.mrb[0].mxu0
    %v1391 = vpop.f32.mrb[0].mxu0
    %1392 = vdwg.mxu0
    %1393 = vrot.lane.b32.xlu0 %v1094, 104
    %v1394 = vpop.permute.xlu0 %1393
    %1395 = vrot.lane.b32.xlu0 %v1094, 72
    %v1396 = vpop.permute.xlu0 %1395
    %v1398 = vsel %vm222, %v1394, 0
    %v1401 = vsel %vm222, %v1396, 0
    %1403 = vmatprep.subr.bf16.mxu0 0
    %1404 = vmatpush1.bf16.xpose.msra.mxu0 %v1401
    %1405 = vmatprep.subr.bf16.mxu0 0
    %1406 = vmatpush1.bf16.xpose.msra.mxu0 0
    %1407 = vmatprep.subr.bf16.mxu0 0
    %1408 = vmatpush1.bf16.xpose.msra.mxu0 0
    %1409 = vmatprep.subr.bf16.mxu0 0
    %1410 = vmatpush1.bf16.xpose.msra.mxu0 0
    %1411 = vmatprep.subr.bf16.mxu0 0
    %1412 = vmatpush1.bf16.xpose.msra.mxu0 0
    %1413 = vmatprep.subr.bf16.mxu0 0
    %1414 = vmatpush1.bf16.xpose.msra.mxu0 0
    %1415 = vmatprep.subr.bf16.mxu0 0
    %1416 = vmatpush1.bf16.xpose.msra.mxu0 0
    %1417 = vmatprep.subr.bf16.mxu0 0
    %1418 = vmatpush1.bf16.xpose.msra.mxu0 0
    %1419 = vmatprep.subr.bf16.mxu0 0
    %1420 = vmatpush1.bf16.xpose.msra.mxu0 0
    %1421 = vmatprep.subr.bf16.mxu0 0
    %1422 = vmatpush1.bf16.xpose.msra.mxu0 0
    %1423 = vmatprep.subr.bf16.mxu0 0
    %1424 = vmatpush1.bf16.xpose.msra.mxu0 0
    %1425 = vmatprep.subr.bf16.mxu0 0
    %1426 = vmatpush1.bf16.xpose.msra.mxu0 0
    %1427 = vmatprep.subr.bf16.mxu0 0
    %1428 = vmatpush1.bf16.xpose.msra.mxu0 0
    %1429 = vmatprep.subr.bf16.mxu0 0
    %1430 = vmatpush1.bf16.xpose.msra.mxu0 0
    %1431 = vmatprep.subr.bf16.mxu0 0
    %1432 = vmatpush1.bf16.xpose.msra.mxu0 0
    %1433 = vmatprep.subr.bf16.mxu0 0
    %1434 = vmatpush1.bf16.xpose.msra.mxu0 0
    %1435 = vmatprep.mubr.bf16.mxu0 0
    %1436 = vmatmul.mubr.bf16.gmra.mrb[0].mxu0 %v1398
    %v1437 = vpop.f32.mrb[0].mxu0
    %v1438 = vadd.f32 0.0, %v1437
    %v1439 = vpop.f32.mrb[0].mxu0
    %v1440 = vpop.f32.mrb[0].mxu0
    %v1441 = vpop.f32.mrb[0].mxu0
    %1442 = vdwg.mxu0
    %1443 = vrot.lane.b32.xlu0 %v1094, 100
    %v1444 = vpop.permute.xlu0 %1443
    %1445 = vrot.lane.b32.xlu0 %v1094, 68
    %v1446 = vpop.permute.xlu0 %1445
    %v1448 = vsel %vm222, %v1444, 0
    %v1451 = vsel %vm222, %v1446, 0
    %1453 = vmatprep.subr.bf16.mxu0 0
    %1454 = vmatpush1.bf16.xpose.msra.mxu0 %v1451
    %1455 = vmatprep.subr.bf16.mxu0 0
    %1456 = vmatpush1.bf16.xpose.msra.mxu0 0
    %1457 = vmatprep.subr.bf16.mxu0 0
    %1458 = vmatpush1.bf16.xpose.msra.mxu0 0
    %1459 = vmatprep.subr.bf16.mxu0 0
    %1460 = vmatpush1.bf16.xpose.msra.mxu0 0
    %1461 = vmatprep.subr.bf16.mxu0 0
    %1462 = vmatpush1.bf16.xpose.msra.mxu0 0
    %1463 = vmatprep.subr.bf16.mxu0 0
    %1464 = vmatpush1.bf16.xpose.msra.mxu0 0
    %1465 = vmatprep.subr.bf16.mxu0 0
    %1466 = vmatpush1.bf16.xpose.msra.mxu0 0
    %1467 = vmatprep.subr.bf16.mxu0 0
    %1468 = vmatpush1.bf16.xpose.msra.mxu0 0
    %1469 = vmatprep.subr.bf16.mxu0 0
    %1470 = vmatpush1.bf16.xpose.msra.mxu0 0
    %1471 = vmatprep.subr.bf16.mxu0 0
    %1472 = vmatpush1.bf16.xpose.msra.mxu0 0
    %1473 = vmatprep.subr.bf16.mxu0 0
    %1474 = vmatpush1.bf16.xpose.msra.mxu0 0
    %1475 = vmatprep.subr.bf16.mxu0 0
    %1476 = vmatpush1.bf16.xpose.msra.mxu0 0
    %1477 = vmatprep.subr.bf16.mxu0 0
    %1478 = vmatpush1.bf16.xpose.msra.mxu0 0
    %1479 = vmatprep.subr.bf16.mxu0 0
    %1480 = vmatpush1.bf16.xpose.msra.mxu0 0
    %1481 = vmatprep.subr.bf16.mxu0 0
    %1482 = vmatpush1.bf16.xpose.msra.mxu0 0
    %1483 = vmatprep.subr.bf16.mxu0 0
    %1484 = vmatpush1.bf16.xpose.msra.mxu0 0
    %1485 = vmatprep.mubr.bf16.mxu0 0
    %1486 = vmatmul.mubr.bf16.gmra.mrb[0].mxu0 %v1448
    %v1487 = vpop.f32.mrb[0].mxu0
    %v1488 = vadd.f32 0.0, %v1487
    %v1489 = vpop.f32.mrb[0].mxu0
    %v1490 = vpop.f32.mrb[0].mxu0
    %v1491 = vpop.f32.mrb[0].mxu0
    %1492 = vdwg.mxu0
    %1494 = vrot.lane.b32.xlu0 %v1188, 8
    %v1495 = vpop.permute.xlu0 %1494
    %1498 = vrot.lane.b32.xlu0 %v1238, 16
    %v1499 = vpop.permute.xlu0 %1498
    %1502 = vrot.lane.b32.xlu0 %v1288, 24
    %v1503 = vpop.permute.xlu0 %1502
    %1506 = vrot.lane.b32.xlu0 %v1338, 32
    %v1507 = vpop.permute.xlu0 %1506
    %1510 = vrot.lane.b32.xlu0 %v1388, 40
    %v1511 = vpop.permute.xlu0 %1510
    %1514 = vrot.lane.b32.xlu0 %v1438, 48
    %v1515 = vpop.permute.xlu0 %1514
    %1518 = vrot.lane.b32.xlu0 %v1488, 56
    %v1519 = vpop.permute.xlu0 %1518
    %v1521 = vsel %vm647, %v1138, %v1495
    %v1522 = vsel %vm649, %v1521, %v1499
    %v1523 = vsel %vm651, %v1522, %v1503
    %v1524 = vsel %vm92, %v1523, %v1507
    %v1525 = vsel %vm654, %v1524, %v1511
    %v1526 = vsel %vm656, %v1525, %v1515
    %v1527 = vsel %vm658, %v1526, %v1519
    %v1528 = vsel %vm660, %v1527, -inf
    %v1529 = vrot.slane %v1528, 4
    %v1530 = vmax.f32 %v1528, %v1529
    %v1531 = vrot.slane %v1530, 2
    %v1532 = vmax.f32 %v1530, %v1531
    %v1533 = vrot.slane %v1532, 1
    %v1534 = vmax.f32 %v1532, %v1533
    %v1535 = vsub.f32 %v1527, %v1534
    %v1536 = vmul.f32 %v1535, 1.442695
    %v1537 = vpow.pop %v1536
    %v1538 = vsel %vm660, %v1537, 0.0
    %v1539 = vrot.slane %v1538, 4
    %v1540 = vadd.f32 %v1538, %v1539
    %v1541 = vrot.slane %v1540, 2
    %v1542 = vadd.f32 %v1540, %v1541
    %v1543 = vrot.slane %v1542, 1
    %v1544 = vadd.f32 %v1542, %v1543
    %v1545 = vrcp.pop %v1544
    %v1546 = vmul.f32 %v1537, %v1545
    %v1547 = vpack.c.bf16 %v1546, %v1546
    %1549 = vrot.lane.b32.xlu0 %v1547, 120
    %v1550 = vpop.permute.xlu0 %1549
    %v1551 = vrot.slane %v217, 4
    %1552 = vrot.lane.b32.xlu0 %v1551, 96
    %v1553 = vpop.permute.xlu0 %1552
    %v1555 = vsel %vm647, %v1550, 0
    %v1558 = vsel %vm690, %v1553, 0
    %1560 = vmatprep.subr.bf16.mxu0 0
    %1561 = vmatpush1.bf16.msra.mxu0 %v1558
    %1562 = vmatprep.subr.bf16.mxu0 0
    %1563 = vmatpush1.bf16.msra.mxu0 0
    %1564 = vmatprep.subr.bf16.mxu0 0
    %1565 = vmatpush1.bf16.msra.mxu0 0
    %1566 = vmatprep.subr.bf16.mxu0 0
    %1567 = vmatpush1.bf16.msra.mxu0 0
    %1568 = vmatprep.subr.bf16.mxu0 0
    %1569 = vmatpush1.bf16.msra.mxu0 0
    %1570 = vmatprep.subr.bf16.mxu0 0
    %1571 = vmatpush1.bf16.msra.mxu0 0
    %1572 = vmatprep.subr.bf16.mxu0 0
    %1573 = vmatpush1.bf16.msra.mxu0 0
    %1574 = vmatprep.subr.bf16.mxu0 0
    %1575 = vmatpush1.bf16.msra.mxu0 0
    %1576 = vmatprep.subr.bf16.mxu0 0
    %1577 = vmatpush1.bf16.msra.mxu0 0
    %1578 = vmatprep.subr.bf16.mxu0 0
    %1579 = vmatpush1.bf16.msra.mxu0 0
    %1580 = vmatprep.subr.bf16.mxu0 0
    %1581 = vmatpush1.bf16.msra.mxu0 0
    %1582 = vmatprep.subr.bf16.mxu0 0
    %1583 = vmatpush1.bf16.msra.mxu0 0
    %1584 = vmatprep.subr.bf16.mxu0 0
    %1585 = vmatpush1.bf16.msra.mxu0 0
    %1586 = vmatprep.subr.bf16.mxu0 0
    %1587 = vmatpush1.bf16.msra.mxu0 0
    %1588 = vmatprep.subr.bf16.mxu0 0
    %1589 = vmatpush1.bf16.msra.mxu0 0
    %1590 = vmatprep.subr.bf16.mxu0 0
    %1591 = vmatpush1.bf16.msra.mxu0 0
    %1592 = vmatprep.mubr.bf16.mxu0 0
    %1593 = vmatmul.mubr.bf16.gmra.mrb[0].mxu0 %v1555
    %v1594 = vpop.f32.mrb[0].mxu0
    %v1595 = vadd.f32 0.0, %v1594
    %v1596 = vpop.f32.mrb[0].mxu0
    %v1597 = vpop.f32.mrb[0].mxu0
    %v1598 = vpop.f32.mrb[0].mxu0
    %1599 = vdwg.mxu0
    %v1601 = vsel %vm647, %v1547, 0
    %v1604 = vsel %vm690, %v1551, 0
    %1606 = vmatprep.subr.bf16.mxu0 0
    %1607 = vmatpush1.bf16.msra.mxu0 %v1604
    %1608 = vmatprep.subr.bf16.mxu0 0
    %1609 = vmatpush1.bf16.msra.mxu0 0
    %1610 = vmatprep.subr.bf16.mxu0 0
    %1611 = vmatpush1.bf16.msra.mxu0 0
    %1612 = vmatprep.subr.bf16.mxu0 0
    %1613 = vmatpush1.bf16.msra.mxu0 0
    %1614 = vmatprep.subr.bf16.mxu0 0
    %1615 = vmatpush1.bf16.msra.mxu0 0
    %1616 = vmatprep.subr.bf16.mxu0 0
    %1617 = vmatpush1.bf16.msra.mxu0 0
    %1618 = vmatprep.subr.bf16.mxu0 0
    %1619 = vmatpush1.bf16.msra.mxu0 0
    %1620 = vmatprep.subr.bf16.mxu0 0
    %1621 = vmatpush1.bf16.msra.mxu0 0
    %1622 = vmatprep.subr.bf16.mxu0 0
    %1623 = vmatpush1.bf16.msra.mxu0 0
    %1624 = vmatprep.subr.bf16.mxu0 0
    %1625 = vmatpush1.bf16.msra.mxu0 0
    %1626 = vmatprep.subr.bf16.mxu0 0
    %1627 = vmatpush1.bf16.msra.mxu0 0
    %1628 = vmatprep.subr.bf16.mxu0 0
    %1629 = vmatpush1.bf16.msra.mxu0 0
    %1630 = vmatprep.subr.bf16.mxu0 0
    %1631 = vmatpush1.bf16.msra.mxu0 0
    %1632 = vmatprep.subr.bf16.mxu0 0
    %1633 = vmatpush1.bf16.msra.mxu0 0
    %1634 = vmatprep.subr.bf16.mxu0 0
    %1635 = vmatpush1.bf16.msra.mxu0 0
    %1636 = vmatprep.subr.bf16.mxu0 0
    %1637 = vmatpush1.bf16.msra.mxu0 0
    %1638 = vmatprep.mubr.bf16.mxu0 0
    %1639 = vmatmul.mubr.bf16.gmra.mrb[0].mxu0 %v1601
    %v1640 = vpop.f32.mrb[0].mxu0
    %v1641 = vadd.f32 %v1595, %v1640
    %v1642 = vpop.f32.mrb[0].mxu0
    %v1643 = vpop.f32.mrb[0].mxu0
    %v1644 = vpop.f32.mrb[0].mxu0
    %1645 = vdwg.mxu0
    %1646 = vrot.lane.b32.xlu0 %v1547, 112
    %v1647 = vpop.permute.xlu0 %1646
    %1648 = vrot.lane.b32.xlu0 %v1551, 64
    %v1649 = vpop.permute.xlu0 %1648
    %v1651 = vsel %vm647, %v1647, 0
    %v1654 = vsel %vm690, %v1649, 0
    %1656 = vmatprep.subr.bf16.mxu0 0
    %1657 = vmatpush1.bf16.msra.mxu0 %v1654
    %1658 = vmatprep.subr.bf16.mxu0 0
    %1659 = vmatpush1.bf16.msra.mxu0 0
    %1660 = vmatprep.subr.bf16.mxu0 0
    %1661 = vmatpush1.bf16.msra.mxu0 0
    %1662 = vmatprep.subr.bf16.mxu0 0
    %1663 = vmatpush1.bf16.msra.mxu0 0
    %1664 = vmatprep.subr.bf16.mxu0 0
    %1665 = vmatpush1.bf16.msra.mxu0 0
    %1666 = vmatprep.subr.bf16.mxu0 0
    %1667 = vmatpush1.bf16.msra.mxu0 0
    %1668 = vmatprep.subr.bf16.mxu0 0
    %1669 = vmatpush1.bf16.msra.mxu0 0
    %1670 = vmatprep.subr.bf16.mxu0 0
    %1671 = vmatpush1.bf16.msra.mxu0 0
    %1672 = vmatprep.subr.bf16.mxu0 0
    %1673 = vmatpush1.bf16.msra.mxu0 0
    %1674 = vmatprep.subr.bf16.mxu0 0
    %1675 = vmatpush1.bf16.msra.mxu0 0
    %1676 = vmatprep.subr.bf16.mxu0 0
    %1677 = vmatpush1.bf16.msra.mxu0 0
    %1678 = vmatprep.subr.bf16.mxu0 0
    %1679 = vmatpush1.bf16.msra.mxu0 0
    %1680 = vmatprep.subr.bf16.mxu0 0
    %1681 = vmatpush1.bf16.msra.mxu0 0
    %1682 = vmatprep.subr.bf16.mxu0 0
    %1683 = vmatpush1.bf16.msra.mxu0 0
    %1684 = vmatprep.subr.bf16.mxu0 0
    %1685 = vmatpush1.bf16.msra.mxu0 0
    %1686 = vmatprep.subr.bf16.mxu0 0
    %1687 = vmatpush1.bf16.msra.mxu0 0
    %1688 = vmatprep.mubr.bf16.mxu0 0
    %1689 = vmatmul.mubr.bf16.gmra.mrb[0].mxu0 %v1651
    %v1690 = vpop.f32.mrb[0].mxu0
    %v1691 = vadd.f32 0.0, %v1690
    %v1692 = vpop.f32.mrb[0].mxu0
    %v1693 = vpop.f32.mrb[0].mxu0
    %v1694 = vpop.f32.mrb[0].mxu0
    %1695 = vdwg.mxu0
    %v1696 = vadd.f32 %v1641, %v1691
    %1697 = vrot.lane.b32.xlu0 %v1547, 104
    %v1698 = vpop.permute.xlu0 %1697
    %1699 = vrot.lane.b32.xlu0 %v1551, 32
    %v1700 = vpop.permute.xlu0 %1699
    %v1702 = vsel %vm647, %v1698, 0
    %v1705 = vsel %vm690, %v1700, 0
    %1707 = vmatprep.subr.bf16.mxu0 0
    %1708 = vmatpush1.bf16.msra.mxu0 %v1705
    %1709 = vmatprep.subr.bf16.mxu0 0
    %1710 = vmatpush1.bf16.msra.mxu0 0
    %1711 = vmatprep.subr.bf16.mxu0 0
    %1712 = vmatpush1.bf16.msra.mxu0 0
    %1713 = vmatprep.subr.bf16.mxu0 0
    %1714 = vmatpush1.bf16.msra.mxu0 0
    %1715 = vmatprep.subr.bf16.mxu0 0
    %1716 = vmatpush1.bf16.msra.mxu0 0
    %1717 = vmatprep.subr.bf16.mxu0 0
    %1718 = vmatpush1.bf16.msra.mxu0 0
    %1719 = vmatprep.subr.bf16.mxu0 0
    %1720 = vmatpush1.bf16.msra.mxu0 0
    %1721 = vmatprep.subr.bf16.mxu0 0
    %1722 = vmatpush1.bf16.msra.mxu0 0
    %1723 = vmatprep.subr.bf16.mxu0 0
    %1724 = vmatpush1.bf16.msra.mxu0 0
    %1725 = vmatprep.subr.bf16.mxu0 0
    %1726 = vmatpush1.bf16.msra.mxu0 0
    %1727 = vmatprep.subr.bf16.mxu0 0
    %1728 = vmatpush1.bf16.msra.mxu0 0
    %1729 = vmatprep.subr.bf16.mxu0 0
    %1730 = vmatpush1.bf16.msra.mxu0 0
    %1731 = vmatprep.subr.bf16.mxu0 0
    %1732 = vmatpush1.bf16.msra.mxu0 0
    %1733 = vmatprep.subr.bf16.mxu0 0
    %1734 = vmatpush1.bf16.msra.mxu0 0
    %1735 = vmatprep.subr.bf16.mxu0 0
    %1736 = vmatpush1.bf16.msra.mxu0 0
    %1737 = vmatprep.subr.bf16.mxu0 0
    %1738 = vmatpush1.bf16.msra.mxu0 0
    %1739 = vmatprep.mubr.bf16.mxu0 0
    %1740 = vmatmul.mubr.bf16.gmra.mrb[0].mxu0 %v1702
    %v1741 = vpop.f32.mrb[0].mxu0
    %v1742 = vadd.f32 0.0, %v1741
    %v1743 = vpop.f32.mrb[0].mxu0
    %v1744 = vpop.f32.mrb[0].mxu0
    %v1745 = vpop.f32.mrb[0].mxu0
    %1746 = vdwg.mxu0
    %v1747 = vadd.f32 %v1696, %v1742
    %1748 = vrot.lane.b32.xlu0 %v1547, 96
    %v1749 = vpop.permute.xlu0 %1748
    %v1750 = vrot.slane %v218, 4
    %v1752 = vsel %vm647, %v1749, 0
    %v1755 = vsel %vm690, %v1750, 0
    %1757 = vmatprep.subr.bf16.mxu0 0
    %1758 = vmatpush1.bf16.msra.mxu0 %v1755
    %1759 = vmatprep.subr.bf16.mxu0 0
    %1760 = vmatpush1.bf16.msra.mxu0 0
    %1761 = vmatprep.subr.bf16.mxu0 0
    %1762 = vmatpush1.bf16.msra.mxu0 0
    %1763 = vmatprep.subr.bf16.mxu0 0
    %1764 = vmatpush1.bf16.msra.mxu0 0
    %1765 = vmatprep.subr.bf16.mxu0 0
    %1766 = vmatpush1.bf16.msra.mxu0 0
    %1767 = vmatprep.subr.bf16.mxu0 0
    %1768 = vmatpush1.bf16.msra.mxu0 0
    %1769 = vmatprep.subr.bf16.mxu0 0
    %1770 = vmatpush1.bf16.msra.mxu0 0
    %1771 = vmatprep.subr.bf16.mxu0 0
    %1772 = vmatpush1.bf16.msra.mxu0 0
    %1773 = vmatprep.subr.bf16.mxu0 0
    %1774 = vmatpush1.bf16.msra.mxu0 0
    %1775 = vmatprep.subr.bf16.mxu0 0
    %1776 = vmatpush1.bf16.msra.mxu0 0
    %1777 = vmatprep.subr.bf16.mxu0 0
    %1778 = vmatpush1.bf16.msra.mxu0 0
    %1779 = vmatprep.subr.bf16.mxu0 0
    %1780 = vmatpush1.bf16.msra.mxu0 0
    %1781 = vmatprep.subr.bf16.mxu0 0
    %1782 = vmatpush1.bf16.msra.mxu0 0
    %1783 = vmatprep.subr.bf16.mxu0 0
    %1784 = vmatpush1.bf16.msra.mxu0 0
    %1785 = vmatprep.subr.bf16.mxu0 0
    %1786 = vmatpush1.bf16.msra.mxu0 0
    %1787 = vmatprep.subr.bf16.mxu0 0
    %1788 = vmatpush1.bf16.msra.mxu0 0
    %1789 = vmatprep.mubr.bf16.mxu0 0
    %1790 = vmatmul.mubr.bf16.gmra.mrb[0].mxu0 %v1752
    %v1791 = vpop.f32.mrb[0].mxu0
    %v1792 = vadd.f32 0.0, %v1791
    %v1793 = vpop.f32.mrb[0].mxu0
    %v1794 = vpop.f32.mrb[0].mxu0
    %v1795 = vpop.f32.mrb[0].mxu0
    %1796 = vdwg.mxu0
    %v1797 = vadd.f32 %v1747, %v1792
    %1798 = vrot.lane.b32.xlu0 %v1547, 88
    %v1799 = vpop.permute.xlu0 %1798
    %1800 = vrot.lane.b32.xlu0 %v1750, 96
    %v1801 = vpop.permute.xlu0 %1800
    %v1803 = vsel %vm647, %v1799, 0
    %v1806 = vsel %vm690, %v1801, 0
    %1808 = vmatprep.subr.bf16.mxu0 0
    %1809 = vmatpush1.bf16.msra.mxu0 %v1806
    %1810 = vmatprep.subr.bf16.mxu0 0
    %1811 = vmatpush1.bf16.msra.mxu0 0
    %1812 = vmatprep.subr.bf16.mxu0 0
    %1813 = vmatpush1.bf16.msra.mxu0 0
    %1814 = vmatprep.subr.bf16.mxu0 0
    %1815 = vmatpush1.bf16.msra.mxu0 0
    %1816 = vmatprep.subr.bf16.mxu0 0
    %1817 = vmatpush1.bf16.msra.mxu0 0
    %1818 = vmatprep.subr.bf16.mxu0 0
    %1819 = vmatpush1.bf16.msra.mxu0 0
    %1820 = vmatprep.subr.bf16.mxu0 0
    %1821 = vmatpush1.bf16.msra.mxu0 0
    %1822 = vmatprep.subr.bf16.mxu0 0
    %1823 = vmatpush1.bf16.msra.mxu0 0
    %1824 = vmatprep.subr.bf16.mxu0 0
    %1825 = vmatpush1.bf16.msra.mxu0 0
    %1826 = vmatprep.subr.bf16.mxu0 0
    %1827 = vmatpush1.bf16.msra.mxu0 0
    %1828 = vmatprep.subr.bf16.mxu0 0
    %1829 = vmatpush1.bf16.msra.mxu0 0
    %1830 = vmatprep.subr.bf16.mxu0 0
    %1831 = vmatpush1.bf16.msra.mxu0 0
    %1832 = vmatprep.subr.bf16.mxu0 0
    %1833 = vmatpush1.bf16.msra.mxu0 0
    %1834 = vmatprep.subr.bf16.mxu0 0
    %1835 = vmatpush1.bf16.msra.mxu0 0
    %1836 = vmatprep.subr.bf16.mxu0 0
    %1837 = vmatpush1.bf16.msra.mxu0 0
    %1838 = vmatprep.subr.bf16.mxu0 0
    %1839 = vmatpush1.bf16.msra.mxu0 0
    %1840 = vmatprep.mubr.bf16.mxu0 0
    %1841 = vmatmul.mubr.bf16.gmra.mrb[0].mxu0 %v1803
    %v1842 = vpop.f32.mrb[0].mxu0
    %v1843 = vadd.f32 0.0, %v1842
    %v1844 = vpop.f32.mrb[0].mxu0
    %v1845 = vpop.f32.mrb[0].mxu0
    %v1846 = vpop.f32.mrb[0].mxu0
    %1847 = vdwg.mxu0
    %v1848 = vadd.f32 %v1797, %v1843
    %1849 = vrot.lane.b32.xlu0 %v1547, 80
    %v1850 = vpop.permute.xlu0 %1849
    %1851 = vrot.lane.b32.xlu0 %v1750, 64
    %v1852 = vpop.permute.xlu0 %1851
    %v1854 = vsel %vm647, %v1850, 0
    %v1857 = vsel %vm690, %v1852, 0
    %1859 = vmatprep.subr.bf16.mxu0 0
    %1860 = vmatpush1.bf16.msra.mxu0 %v1857
    %1861 = vmatprep.subr.bf16.mxu0 0
    %1862 = vmatpush1.bf16.msra.mxu0 0
    %1863 = vmatprep.subr.bf16.mxu0 0
    %1864 = vmatpush1.bf16.msra.mxu0 0
    %1865 = vmatprep.subr.bf16.mxu0 0
    %1866 = vmatpush1.bf16.msra.mxu0 0
    %1867 = vmatprep.subr.bf16.mxu0 0
    %1868 = vmatpush1.bf16.msra.mxu0 0
    %1869 = vmatprep.subr.bf16.mxu0 0
    %1870 = vmatpush1.bf16.msra.mxu0 0
    %1871 = vmatprep.subr.bf16.mxu0 0
    %1872 = vmatpush1.bf16.msra.mxu0 0
    %1873 = vmatprep.subr.bf16.mxu0 0
    %1874 = vmatpush1.bf16.msra.mxu0 0
    %1875 = vmatprep.subr.bf16.mxu0 0
    %1876 = vmatpush1.bf16.msra.mxu0 0
    %1877 = vmatprep.subr.bf16.mxu0 0
    %1878 = vmatpush1.bf16.msra.mxu0 0
    %1879 = vmatprep.subr.bf16.mxu0 0
    %1880 = vmatpush1.bf16.msra.mxu0 0
    %1881 = vmatprep.subr.bf16.mxu0 0
    %1882 = vmatpush1.bf16.msra.mxu0 0
    %1883 = vmatprep.subr.bf16.mxu0 0
    %1884 = vmatpush1.bf16.msra.mxu0 0
    %1885 = vmatprep.subr.bf16.mxu0 0
    %1886 = vmatpush1.bf16.msra.mxu0 0
    %1887 = vmatprep.subr.bf16.mxu0 0
    %1888 = vmatpush1.bf16.msra.mxu0 0
    %1889 = vmatprep.subr.bf16.mxu0 0
    %1890 = vmatpush1.bf16.msra.mxu0 0
    %1891 = vmatprep.mubr.bf16.mxu0 0
    %1892 = vmatmul.mubr.bf16.gmra.mrb[0].mxu0 %v1854
    %v1893 = vpop.f32.mrb[0].mxu0
    %v1894 = vadd.f32 0.0, %v1893
    %v1895 = vpop.f32.mrb[0].mxu0
    %v1896 = vpop.f32.mrb[0].mxu0
    %v1897 = vpop.f32.mrb[0].mxu0
    %1898 = vdwg.mxu0
    %v1899 = vadd.f32 %v1848, %v1894
    %1900 = vrot.lane.b32.xlu0 %v1547, 72
    %v1901 = vpop.permute.xlu0 %1900
    %1902 = vrot.lane.b32.xlu0 %v1750, 32
    %v1903 = vpop.permute.xlu0 %1902
    %v1905 = vsel %vm647, %v1901, 0
    %v1908 = vsel %vm690, %v1903, 0
    %1910 = vmatprep.subr.bf16.mxu0 0
    %1911 = vmatpush1.bf16.msra.mxu0 %v1908
    %1912 = vmatprep.subr.bf16.mxu0 0
    %1913 = vmatpush1.bf16.msra.mxu0 0
    %1914 = vmatprep.subr.bf16.mxu0 0
    %1915 = vmatpush1.bf16.msra.mxu0 0
    %1916 = vmatprep.subr.bf16.mxu0 0
    %1917 = vmatpush1.bf16.msra.mxu0 0
    %1918 = vmatprep.subr.bf16.mxu0 0
    %1919 = vmatpush1.bf16.msra.mxu0 0
    %1920 = vmatprep.subr.bf16.mxu0 0
    %1921 = vmatpush1.bf16.msra.mxu0 0
    %1922 = vmatprep.subr.bf16.mxu0 0
    %1923 = vmatpush1.bf16.msra.mxu0 0
    %1924 = vmatprep.subr.bf16.mxu0 0
    %1925 = vmatpush1.bf16.msra.mxu0 0
    %1926 = vmatprep.subr.bf16.mxu0 0
    %1927 = vmatpush1.bf16.msra.mxu0 0
    %1928 = vmatprep.subr.bf16.mxu0 0
    %1929 = vmatpush1.bf16.msra.mxu0 0
    %1930 = vmatprep.subr.bf16.mxu0 0
    %1931 = vmatpush1.bf16.msra.mxu0 0
    %1932 = vmatprep.subr.bf16.mxu0 0
    %1933 = vmatpush1.bf16.msra.mxu0 0
    %1934 = vmatprep.subr.bf16.mxu0 0
    %1935 = vmatpush1.bf16.msra.mxu0 0
    %1936 = vmatprep.subr.bf16.mxu0 0
    %1937 = vmatpush1.bf16.msra.mxu0 0
    %1938 = vmatprep.subr.bf16.mxu0 0
    %1939 = vmatpush1.bf16.msra.mxu0 0
    %1940 = vmatprep.subr.bf16.mxu0 0
    %1941 = vmatpush1.bf16.msra.mxu0 0
    %1942 = vmatprep.mubr.bf16.mxu0 0
    %1943 = vmatmul.mubr.bf16.gmra.mrb[0].mxu0 %v1905
    %v1944 = vpop.f32.mrb[0].mxu0
    %v1945 = vadd.f32 0.0, %v1944
    %v1946 = vpop.f32.mrb[0].mxu0
    %v1947 = vpop.f32.mrb[0].mxu0
    %v1948 = vpop.f32.mrb[0].mxu0
    %1949 = vdwg.mxu0
    %v1950 = vadd.f32 %v1899, %v1945
    %v1951 = vld [vmem:[%s5] sm:$0x1]
    %v1953 = vlaneseq
    %v1954 = vshrl.u32 %v1953, 7
    %v1955 = vsub.s32 0, %v1954
    %v1956 = vrot.slane %v1951, %v1955
    %v1958 = vadd.f32 %v1950, %v1956
    %1959 = vst.msk [vmem:[#allocation8 + $0x8] sm:$0xff] %vm92, %v1958
    // Predicated region
    $region38: #{tpu_custom_call.1} parent=1 // pred_check
      _
    $region39: #{tpu_custom_call.1} parent=1 // pred_check_branch
      %1961 = sbr.rel (0) target = $region41
    $region40: #{tpu_custom_call.1} parent=1 // pred_region
      %s1963 = ssub.s32 256, 256
      %1964 = vsyncadd [#allocation4], %s1963
      %s1965 = sshll.u32 [#allocation8], 4
      %s1966 = int_to_ptr.vmem [resolvable:$true] %s1965
      %1971 = dma.vmem_to_hbm [thread:$0]  %s1966, 256, %s6, [#allocation4], 128, 128, 8
    $region41: #{tpu_custom_call.1} parent=1 // pred_fallthru
      _
    // Predicated region
    $region42: #{tpu_custom_call.1} parent=1 // pred_check
      _
    $region43: #{tpu_custom_call.1} parent=1 // pred_check_branch
      %1973 = sbr.rel (0) target = $region45
    $region44: #{tpu_custom_call.1} parent=1 // pred_region
      %1974 = dma.done [#allocation4], 256
    $region45: #{tpu_custom_call.1} parent=1 // pred_fallthru
      _
    %1975 = vsyncpa [#allocation3], 1
    %1976 = vsyncpa [#allocation6], 1
    %1977 = vsyncpa [#allocation4], 1

</llo_original>
